<compile_context>
chip_gen: v5e
topology: v5e:2x2
jax: 0.10.0
libtpu: 0.0.40
codegen_flags: <defaults>
</compile_context>

<pallas_src>
import functools
import math

import jax
import jax.numpy as jnp
from jax.experimental import pallas as pl
from jax.experimental.pallas import tpu as pltpu


def _layernorm(x, w, b, eps=1e-5):
    mu = jnp.mean(x, axis=-1, keepdims=True)
    xc = x - mu
    var = jnp.mean(xc * xc, axis=-1, keepdims=True)
    return xc * jax.lax.rsqrt(var + eps) * w + b


# --------------------------------------------------------------------------
# Stage 1: z = LN1(skip_linear(concat(x, skip)));  q,k,v = z @ W_qkv
# --------------------------------------------------------------------------
def prenorm_qkv_kernel(x_ref, skip_ref, w_skip_ref, vecs1_ref, w_qkv_ref,
                       z_ref, q_ref, k_ref, v_ref, *, dim):
    f32 = jnp.float32
    bf16 = jnp.bfloat16

    x = x_ref[0]        # [TL, C] bf16
    sk = skip_ref[0]    # [TL, C] bf16

    # skip_linear(concat([x, skip], -1)) without materializing the concat.
    w_a = w_skip_ref[:dim, :]
    w_b = w_skip_ref[dim:, :]
    z = (jnp.dot(x, w_a, preferred_element_type=f32)
         + jnp.dot(sk, w_b, preferred_element_type=f32)
         + vecs1_ref[0:1, :])                       # + b_skip
    z = _layernorm(z, vecs1_ref[1:2, :], vecs1_ref[2:3, :])   # LN1
    z_ref[0] = z.astype(z_ref.dtype)

    # QKV projection (softmax scale already folded into the q columns).
    qkv = jnp.dot(z.astype(bf16), w_qkv_ref[...],
                  preferred_element_type=f32).astype(bf16)    # [TL, 3C]
    q_ref[0] = qkv[:, :dim]
    k_ref[0] = qkv[:, dim:2 * dim]
    v_ref[0] = qkv[:, 2 * dim:]


# --------------------------------------------------------------------------
# Stage 2: attention (q tile vs full K/V) + proj + residual + LN2 + MLP +
#          residual + LN3
# --------------------------------------------------------------------------
def attn_mlp_kernel(z_ref, q_ref, k_ref, v_ref,
                    w_proj_ref, w_fc1_ref, b_fc1_ref, w_fc2_ref, vecs2_ref,
                    o_ref, *, dim, num_heads):
    f32 = jnp.float32
    bf16 = jnp.bfloat16
    head_dim = dim // num_heads

    q = q_ref[0]      # [TL, C] bf16 (pre-scaled q)
    k = k_ref[0]      # [L,  C] bf16
    v = v_ref[0]      # [L,  C] bf16
    z = z_ref[0]      # [TL, C] f32  (residual stream)

    # Per-head softmax(q k^T) v; heads are written back at their lane offsets
    # via a single concat, then ONE K=C projection matmul (full MXU width).
    o_heads = []
    for h in range(num_heads):
        lo = h * head_dim
        hi = lo + head_dim
        s = jnp.einsum('ld,md->lm', q[:, lo:hi], k[:, lo:hi],
                       preferred_element_type=f32)             # [TL, L]
        s = s - jnp.max(s, axis=-1, keepdims=True)
        p = jnp.exp(s)
        p = p * pl.reciprocal(jnp.sum(p, axis=-1, keepdims=True), approx=True)
        o_h = jnp.dot(p.astype(bf16), v[:, lo:hi],
                      preferred_element_type=f32)              # [TL, D]
        o_heads.append(o_h.astype(bf16))
    o_cat = jnp.concatenate(o_heads, axis=-1)                  # [TL, C] bf16

    attn = (jnp.dot(o_cat, w_proj_ref[...], preferred_element_type=f32)
            + vecs2_ref[0:1, :])                               # + b_proj

    x = z + attn
    x = _layernorm(x, vecs2_ref[1:2, :], vecs2_ref[2:3, :])    # LN2

    # MLP: fc1 -> GELU(exact erf, matches torch nn.GELU) -> fc2
    h1 = (jnp.dot(x.astype(bf16), w_fc1_ref[...], preferred_element_type=f32)
          + b_fc1_ref[...])
    h1 = jax.nn.gelu(h1, approximate=False)
    mlp = (jnp.dot(h1.astype(bf16), w_fc2_ref[...], preferred_element_type=f32)
           + vecs2_ref[3:4, :])                                # + b_fc2

    x = x + mlp
    x = _layernorm(x, vecs2_ref[4:5, :], vecs2_ref[5:6, :])    # LN3
    o_ref[0] = x.astype(o_ref.dtype)


# --------------------------------------------------------------------------
# Wrapper
# --------------------------------------------------------------------------
def _choose_tile_l(L, maximum=256):
    for t in (256, 128, 64, 32, 16, 8):
        if t <= maximum and L % t == 0:
            return t
    return L


def _vmem_limit(needed_bytes):
    """Generation-aware scoped-VMEM limit with ~15% headroom."""
    try:
        cap = int(pltpu.get_tpu_info().vmem_capacity_bytes)
    except Exception:
        cap = 64 * 1024 * 1024   # conservative (v7x per-TC) fallback
    need = int(1.5 * needed_bytes)          # compiler-internal scratch headroom
    need = max(need, 32 * 1024 * 1024)
    return int(min(need, int(0.85 * cap)))


def _bytes_of(*arrs):
    return sum(int(a.size) * a.dtype.itemsize for a in arrs)


def _block_forward(x, skip, params, *, dim, num_heads, out_dtype,
                   tile_l, single_buffer_weights):
    B, L, C = x.shape
    assert C == dim and dim % num_heads == 0
    head_dim = dim // num_heads
    scale = head_dim ** (-0.5)
    hidden = params["w_fc1"].shape[1]
    bf16 = jnp.bfloat16

    TL = tile_l if tile_l is not None else _choose_tile_l(L)
    assert L % TL == 0
    n_lt = L // TL

    # ---- weight prep (plain JAX, outside the kernel) ----
    # Fold softmax scale into the q columns of W_qkv; cast matmul weights to
    # bf16.  Small per-channel params are packed into two [K, C] arrays.
    w_skip = params["w_skip"].astype(bf16)
    w_qkv = params["w_qkv"].at[:, :dim].multiply(scale).astype(bf16)
    w_proj = params["w_proj"].astype(bf16)
    w_fc1 = params["w_fc1"].astype(bf16)
    w_fc2 = params["w_fc2"].astype(bf16)
    b_fc1 = params["b_fc1"]
    vecs1 = jnp.concatenate(
        [params["b_skip"], params["ln1_w"], params["ln1_b"]], axis=0)   # [3, C]
    vecs2 = jnp.concatenate(
        [params["b_proj"], params["ln2_w"], params["ln2_b"],
         params["b_fc2"], params["ln3_w"], params["ln3_b"]], axis=0)    # [6, C]

    wmult = 1 if single_buffer_weights else 2

    def w_spec(shape):
        nd = len(shape)
        idx = lambda b, l, _nd=nd: (0,) * _nd
        if single_buffer_weights:
            # Constant-index blocks are fetched once; single-buffering halves
            # their VMEM footprint at zero DMA cost.
            return pl.BlockSpec(shape, idx, pipeline_mode=pl.Buffered(1))
        return pl.BlockSpec(shape, idx)

    def tile_spec():
        return pl.BlockSpec((1, TL, C), lambda b, l: (b, l, 0))

    def full_seq_spec():
        return pl.BlockSpec((1, L, C), lambda b, l: (b, 0, 0))

    # ---- stage 1: skip_linear + LN1 + QKV ----
    w1_bytes = _bytes_of(w_skip, vecs1, w_qkv)
    stream1 = TL * C * (2 + 2 + 4 + 2 + 2 + 2)          # x, skip, z, q, k, v
    inter1 = TL * 3 * C * 4 + 4 * TL * C * 4             # qkv f32 + LN temps
    vmem1 = _vmem_limit(wmult * w1_bytes + 2 * stream1 + inter1)

    k1 = functools.partial(prenorm_qkv_kernel, dim=dim)
    z, q, kk, vv = pl.pallas_call(
        k1,
        grid=(B, n_lt),
        in_specs=[tile_spec(), tile_spec(),
                  w_spec((2 * dim, dim)), w_spec((3, dim)),
                  w_spec((dim, 3 * dim))],
        out_specs=(tile_spec(), tile_spec(), tile_spec(), tile_spec()),
        out_shape=(jax.ShapeDtypeStruct((B, L, C), jnp.float32),
                   jax.ShapeDtypeStruct((B, L, C), bf16),
                   jax.ShapeDtypeStruct((B, L, C), bf16),
                   jax.ShapeDtypeStruct((B, L, C), bf16)),
        compiler_params=pltpu.CompilerParams(
            dimension_semantics=("parallel", "parallel"),
            vmem_limit_bytes=vmem1),
    )(x.astype(bf16), skip.astype(bf16), w_skip, vecs1, w_qkv)

    # ---- stage 2: attention + proj + LN2 + MLP + LN3 ----
    w2_bytes = _bytes_of(w_proj, w_fc1, b_fc1, w_fc2, vecs2)
    stream2 = (TL * C * 4 + TL * C * 2 + 2 * L * C * 2
               + TL * C * jnp.dtype(out_dtype).itemsize)
    inter2 = 2 * TL * L * 4 + TL * hidden * 4 + TL * hidden * 2 + 6 * TL * C * 4
    vmem2 = _vmem_limit(wmult * w2_bytes + 2 * stream2 + inter2)

    k2 = functools.partial(attn_mlp_kernel, dim=dim, num_heads=num_heads)
    out = pl.pallas_call(
        k2,
        grid=(B, n_lt),
        in_specs=[tile_spec(), tile_spec(),            # z tile, q tile
                  full_seq_spec(), full_seq_spec(),    # full K, full V
                  w_spec((dim, dim)), w_spec((dim, hidden)),
                  w_spec((1, hidden)), w_spec((hidden, dim)),
                  w_spec((6, dim))],
        out_specs=tile_spec(),
        out_shape=jax.ShapeDtypeStruct((B, L, C), out_dtype),
        compiler_params=pltpu.CompilerParams(
            dimension_semantics=("parallel", "parallel"),
            vmem_limit_bytes=vmem2),
    )(z, q, kk, vv, w_proj, w_fc1, b_fc1, w_fc2, vecs2)
    return out


def block_forward(x, skip, params, *, dim, num_heads,
                  out_dtype=jnp.float32, tile_l=None):
    # Prefer single-buffered weight blocks (constant index_map -> fetched once,
    # half the weight VMEM); fall back to default double-buffering if the
    # installed jax rejects pipeline_mode=pl.Buffered(1).
    try:
        out = _block_forward(x, skip, params, dim=dim, num_heads=num_heads,
                             out_dtype=out_dtype, tile_l=tile_l,
                             single_buffer_weights=True)
        return jax.block_until_ready(out)
    except Exception:
        out = _block_forward(x, skip, params, dim=dim, num_heads=num_heads,
                             out_dtype=out_dtype, tile_l=tile_l,
                             single_buffer_weights=False)
        return jax.block_until_ready(out)


# --------------------------------------------------------------------------
# Pure-JAX f32 reference (matches the torch module, dropout = identity)
# --------------------------------------------------------------------------
def block_reference(x, skip, p, *, dim, num_heads):
    head_dim = dim // num_heads
    scale = head_dim ** (-0.5)

    def ln(x, w, b, eps=1e-5):
        mu = jnp.mean(x, -1, keepdims=True)
        var = jnp.mean((x - mu) ** 2, -1, keepdims=True)
        return (x - mu) / jnp.sqrt(var + eps) * w + b

    x = jnp.concatenate([x, skip], -1) @ p["w_skip"] + p["b_skip"]
    x = ln(x, p["ln1_w"], p["ln1_b"])

    B, L, C = x.shape
    qkv = x @ p["w_qkv"]
    qkv = qkv.reshape(B, L, 3, num_heads, head_dim)
    qkv = jnp.transpose(qkv, (2, 0, 3, 1, 4))
    q, k, v = qkv[0], qkv[1], qkv[2]
    attn = jnp.einsum("bhld,bhmd->bhlm", q, k) * scale
    attn = jax.nn.softmax(attn, axis=-1)
    o = jnp.einsum("bhlm,bhmd->bhld", attn, v)
    o = jnp.transpose(o, (0, 2, 1, 3)).reshape(B, L, C)
    o = o @ p["w_proj"] + p["b_proj"]

    x = x + o
    x = ln(x, p["ln2_w"], p["ln2_b"])
    h = jax.nn.gelu(x @ p["w_fc1"] + p["b_fc1"], approximate=False)
    x = x + (h @ p["w_fc2"] + p["b_fc2"])
    x = ln(x, p["ln3_w"], p["ln3_b"])
    return x


def make_params(key, dim, mlp_ratio=4.0):
    hidden = int(dim * mlp_ratio)
    ks = jax.random.split(key, 8)

    def lin_w(k, fan_in, fan_out):
        bound = 1.0 / math.sqrt(fan_in)
        return jax.random.uniform(k, (fan_in, fan_out), jnp.float32, -bound, bound)

    def lin_b(k, fan_in, fan_out):
        bound = 1.0 / math.sqrt(fan_in)
        return jax.random.uniform(k, (1, fan_out), jnp.float32, -bound, bound)

    return {
        "w_skip": lin_w(ks[0], 2 * dim, dim),
        "b_skip": lin_b(ks[1], 2 * dim, dim),
        "ln1_w": jnp.ones((1, dim), jnp.float32),
        "ln1_b": jnp.zeros((1, dim), jnp.float32),
        "w_qkv": lin_w(ks[2], dim, 3 * dim),          # qkv_bias=False
        "w_proj": lin_w(ks[3], dim, dim),
        "b_proj": lin_b(ks[4], dim, dim),
        "ln2_w": jnp.ones((1, dim), jnp.float32),
        "ln2_b": jnp.zeros((1, dim), jnp.float32),
        "w_fc1": lin_w(ks[5], dim, hidden),
        "b_fc1": lin_b(ks[6], dim, hidden),
        "w_fc2": lin_w(ks[7], hidden, dim),
        "b_fc2": jnp.zeros((1, dim), jnp.float32),
        "ln3_w": jnp.ones((1, dim), jnp.float32),
        "ln3_b": jnp.zeros((1, dim), jnp.float32),
    }


if __name__ == "__main__":
    B, L, dim, num_heads = 2, 8, 32, 4

    key = jax.random.PRNGKey(0)
    kx, ks, kp = jax.random.split(key, 3)
    x = jax.random.normal(kx, (B, L, dim), jnp.float32)
    skip = jax.random.normal(ks, (B, L, dim), jnp.float32)
    params = make_params(kp, dim)

    out = block_forward(x, skip, params, dim=dim, num_heads=num_heads)

    ref = block_reference(x, skip, params, dim=dim, num_heads=num_heads)
    assert out.shape == (B, L, dim)
    # bf16 matmul operands + approx softmax reciprocal => loosened tolerance
    # vs. the pure-f32 reference.
    err = jnp.max(jnp.abs(out - ref))
    assert jnp.allclose(out, ref, atol=5e-2, rtol=5e-2), f"max abs err {err}"

    print("KERNEL_OK")
</pallas_src>

<mosaic_0001>
module attributes {stable_mosaic.version = 11 : i64} {
  func.func @prenorm_qkv_kernel(%arg0: i32, %arg1: i32, %arg2: memref<1x8x32xbf16, #tpu.memory_space<vmem>>, %arg3: memref<1x8x32xbf16, #tpu.memory_space<vmem>>, %arg4: memref<64x32xbf16, #tpu.memory_space<vmem>>, %arg5: memref<3x32xf32, #tpu.memory_space<vmem>>, %arg6: memref<32x96xbf16, #tpu.memory_space<vmem>>, %arg7: memref<1x8x32xf32, #tpu.memory_space<vmem>>, %arg8: memref<1x8x32xbf16, #tpu.memory_space<vmem>>, %arg9: memref<1x8x32xbf16, #tpu.memory_space<vmem>>, %arg10: memref<1x8x32xbf16, #tpu.memory_space<vmem>>) attributes {dimension_semantics = [#tpu.dimension_semantics<parallel>, #tpu.dimension_semantics<parallel>], iteration_bounds = array<i64: 2, 1>, scalar_prefetch = 0 : i64, scratch_operands = 0 : i64, tpu.core_type = #tpu.core_type<tc>, window_params = [{transform_indices = @transform_0, window_bounds = array<i64: 1, 8, 32>}, {transform_indices = @transform_1, window_bounds = array<i64: 1, 8, 32>}, {pipeline_mode = #tpu.pipeline_mode<synchronous>, transform_indices = @transform_2, window_bounds = array<i64: 64, 32>}, {pipeline_mode = #tpu.pipeline_mode<synchronous>, transform_indices = @transform_3, window_bounds = array<i64: 3, 32>}, {pipeline_mode = #tpu.pipeline_mode<synchronous>, transform_indices = @transform_4, window_bounds = array<i64: 32, 96>}, {transform_indices = @transform_5, window_bounds = array<i64: 1, 8, 32>}, {transform_indices = @transform_6, window_bounds = array<i64: 1, 8, 32>}, {transform_indices = @transform_7, window_bounds = array<i64: 1, 8, 32>}, {transform_indices = @transform_8, window_bounds = array<i64: 1, 8, 32>}]} {
    %c0 = arith.constant 0 : index
    %c0_0 = arith.constant 0 : index
    %c0_1 = arith.constant 0 : index
    %0 = vector.load %arg2[%c0, %c0_0, %c0_1] : memref<1x8x32xbf16, #tpu.memory_space<vmem>>, vector<1x8x32xbf16>
    %1 = vector.shape_cast %0 : vector<1x8x32xbf16> to vector<8x32xbf16>
    %c0_2 = arith.constant 0 : index
    %c0_3 = arith.constant 0 : index
    %c0_4 = arith.constant 0 : index
    %2 = vector.load %arg3[%c0_2, %c0_3, %c0_4] : memref<1x8x32xbf16, #tpu.memory_space<vmem>>, vector<1x8x32xbf16>
    %3 = vector.shape_cast %2 : vector<1x8x32xbf16> to vector<8x32xbf16>
    %c0_5 = arith.constant 0 : index
    %c0_6 = arith.constant 0 : index
    %4 = vector.load %arg4[%c0_5, %c0_6] : memref<64x32xbf16, #tpu.memory_space<vmem>>, vector<32x32xbf16>
    %c32 = arith.constant 32 : index
    %c0_7 = arith.constant 0 : index
    %5 = vector.load %arg4[%c32, %c0_7] : memref<64x32xbf16, #tpu.memory_space<vmem>>, vector<32x32xbf16>
    %cst = arith.constant dense<0.000000e+00> : vector<8x32xf32>
    %6 = tpu.matmul %1, %4, %cst {dimension_numbers = #tpu.dot_dimension_numbers<[1], [0], [0], [1], [0, 0, 1, 1], [], []>} : vector<8x32xbf16>, vector<32x32xbf16>, vector<8x32xf32> -> vector<8x32xf32>
    %cst_8 = arith.constant dense<0.000000e+00> : vector<8x32xf32>
    %7 = tpu.matmul %3, %5, %cst_8 {dimension_numbers = #tpu.dot_dimension_numbers<[1], [0], [0], [1], [0, 0, 1, 1], [], []>} : vector<8x32xbf16>, vector<32x32xbf16>, vector<8x32xf32> -> vector<8x32xf32>
    %8 = arith.addf %6, %7 : vector<8x32xf32>
    %c0_9 = arith.constant 0 : index
    %c0_10 = arith.constant 0 : index
    %9 = vector.load %arg5[%c0_9, %c0_10] : memref<3x32xf32, #tpu.memory_space<vmem>>, vector<1x32xf32>
    %10 = vector.broadcast %9 : vector<1x32xf32> to vector<8x32xf32>
    %11 = arith.addf %8, %10 : vector<8x32xf32>
    %c1 = arith.constant 1 : index
    %c0_11 = arith.constant 0 : index
    %12 = vector.load %arg5[%c1, %c0_11] : memref<3x32xf32, #tpu.memory_space<vmem>>, vector<1x32xf32>
    %c2 = arith.constant 2 : index
    %c0_12 = arith.constant 0 : index
    %13 = vector.load %arg5[%c2, %c0_12] : memref<3x32xf32, #tpu.memory_space<vmem>>, vector<1x32xf32>
    %cst_13 = arith.constant dense<0.000000e+00> : vector<8xf32>
    %14 = vector.multi_reduction <add>, %11, %cst_13 [1] : vector<8x32xf32> to vector<8xf32>
    %15 = vector.shape_cast %14 : vector<8xf32> to vector<8x1xf32>
    %cst_14 = arith.constant 3.200000e+01 : f32
    %16 = vector.broadcast %cst_14 : f32 to vector<8x1xf32>
    %17 = arith.divf %15, %16 : vector<8x1xf32>
    %18 = vector.broadcast %17 : vector<8x1xf32> to vector<8x32xf32>
    %19 = arith.subf %11, %18 : vector<8x32xf32>
    %20 = arith.mulf %19, %19 : vector<8x32xf32>
    %cst_15 = arith.constant dense<0.000000e+00> : vector<8xf32>
    %21 = vector.multi_reduction <add>, %20, %cst_15 [1] : vector<8x32xf32> to vector<8xf32>
    %22 = vector.shape_cast %21 : vector<8xf32> to vector<8x1xf32>
    %cst_16 = arith.constant 3.200000e+01 : f32
    %23 = vector.broadcast %cst_16 : f32 to vector<8x1xf32>
    %24 = arith.divf %22, %23 : vector<8x1xf32>
    %cst_17 = arith.constant 9.99999974E-6 : f32
    %25 = vector.broadcast %cst_17 : f32 to vector<8x1xf32>
    %26 = arith.addf %24, %25 : vector<8x1xf32>
    %27 = math.rsqrt %26 : vector<8x1xf32>
    %28 = vector.broadcast %27 : vector<8x1xf32> to vector<8x32xf32>
    %29 = arith.mulf %19, %28 : vector<8x32xf32>
    %30 = vector.broadcast %12 : vector<1x32xf32> to vector<8x32xf32>
    %31 = arith.mulf %29, %30 : vector<8x32xf32>
    %32 = vector.broadcast %13 : vector<1x32xf32> to vector<8x32xf32>
    %33 = arith.addf %31, %32 : vector<8x32xf32>
    %c0_18 = arith.constant 0 : index
    %c0_19 = arith.constant 0 : index
    %c0_20 = arith.constant 0 : index
    %34 = vector.load %arg7[%c0_18, %c0_19, %c0_20] : memref<1x8x32xf32, #tpu.memory_space<vmem>>, vector<1x8x32xf32>
    %35 = vector.shape_cast %34 : vector<1x8x32xf32> to vector<8x32xf32>
    %36 = vector.shape_cast %33 : vector<8x32xf32> to vector<1x8x32xf32>
    tpu.vector_store %arg7[%c0_18, %c0_19, %c0_20], %36 {strides = array<i32>} : memref<1x8x32xf32, #tpu.memory_space<vmem>>, vector<1x8x32xf32>,
    %37 = arith.truncf %33 : vector<8x32xf32> to vector<8x32xbf16>
    %c0_21 = arith.constant 0 : index
    %c0_22 = arith.constant 0 : index
    %38 = vector.load %arg6[%c0_21, %c0_22] : memref<32x96xbf16, #tpu.memory_space<vmem>>, vector<32x96xbf16>
    %cst_23 = arith.constant dense<0.000000e+00> : vector<8x96xf32>
    %39 = tpu.matmul %37, %38, %cst_23 {dimension_numbers = #tpu.dot_dimension_numbers<[1], [0], [0], [1], [0, 0, 1, 1], [], []>} : vector<8x32xbf16>, vector<32x96xbf16>, vector<8x96xf32> -> vector<8x96xf32>
    %40 = arith.truncf %39 : vector<8x96xf32> to vector<8x96xbf16>
    %41 = vector.extract_strided_slice %40 {offsets = [0, 0], sizes = [8, 32], strides = [1, 1]} : vector<8x96xbf16> to vector<8x32xbf16>
    %c0_24 = arith.constant 0 : index
    %c0_25 = arith.constant 0 : index
    %c0_26 = arith.constant 0 : index
    %42 = vector.load %arg8[%c0_24, %c0_25, %c0_26] : memref<1x8x32xbf16, #tpu.memory_space<vmem>>, vector<1x8x32xbf16>
    %43 = vector.shape_cast %42 : vector<1x8x32xbf16> to vector<8x32xbf16>
    %44 = vector.shape_cast %41 : vector<8x32xbf16> to vector<1x8x32xbf16>
    tpu.vector_store %arg8[%c0_24, %c0_25, %c0_26], %44 {strides = array<i32>} : memref<1x8x32xbf16, #tpu.memory_space<vmem>>, vector<1x8x32xbf16>,
    %45 = vector.extract_strided_slice %40 {offsets = [0, 32], sizes = [8, 32], strides = [1, 1]} : vector<8x96xbf16> to vector<8x32xbf16>
    %c0_27 = arith.constant 0 : index
    %c0_28 = arith.constant 0 : index
    %c0_29 = arith.constant 0 : index
    %46 = vector.load %arg9[%c0_27, %c0_28, %c0_29] : memref<1x8x32xbf16, #tpu.memory_space<vmem>>, vector<1x8x32xbf16>
    %47 = vector.shape_cast %46 : vector<1x8x32xbf16> to vector<8x32xbf16>
    %48 = vector.shape_cast %45 : vector<8x32xbf16> to vector<1x8x32xbf16>
    tpu.vector_store %arg9[%c0_27, %c0_28, %c0_29], %48 {strides = array<i32>} : memref<1x8x32xbf16, #tpu.memory_space<vmem>>, vector<1x8x32xbf16>,
    %49 = vector.extract_strided_slice %40 {offsets = [0, 64], sizes = [8, 32], strides = [1, 1]} : vector<8x96xbf16> to vector<8x32xbf16>
    %c0_30 = arith.constant 0 : index
    %c0_31 = arith.constant 0 : index
    %c0_32 = arith.constant 0 : index
    %50 = vector.load %arg10[%c0_30, %c0_31, %c0_32] : memref<1x8x32xbf16, #tpu.memory_space<vmem>>, vector<1x8x32xbf16>
    %51 = vector.shape_cast %50 : vector<1x8x32xbf16> to vector<8x32xbf16>
    %52 = vector.shape_cast %49 : vector<8x32xbf16> to vector<1x8x32xbf16>
    tpu.vector_store %arg10[%c0_30, %c0_31, %c0_32], %52 {strides = array<i32>} : memref<1x8x32xbf16, #tpu.memory_space<vmem>>, vector<1x8x32xbf16>,
    return
  }
  func.func @transform_0(%arg0: i32, %arg1: i32) -> (i32, i32, i32) {
    %c0_i32 = arith.constant 0 : i32
    %c0_i32_0 = arith.constant 0 : i32
    return %arg0, %arg1, %c0_i32 : i32, i32, i32
  }
  func.func @transform_1(%arg0: i32, %arg1: i32) -> (i32, i32, i32) {
    %c0_i32 = arith.constant 0 : i32
    %c0_i32_0 = arith.constant 0 : i32
    return %arg0, %arg1, %c0_i32 : i32, i32, i32
  }
  func.func @transform_2(%arg0: i32, %arg1: i32) -> (i32, i32) {
    %c0_i32 = arith.constant 0 : i32
    %c0_i32_0 = arith.constant 0 : i32
    %c0_i32_1 = arith.constant 0 : i32
    return %c0_i32, %c0_i32_0 : i32, i32
  }
  func.func @transform_3(%arg0: i32, %arg1: i32) -> (i32, i32) {
    %c0_i32 = arith.constant 0 : i32
    %c0_i32_0 = arith.constant 0 : i32
    %c0_i32_1 = arith.constant 0 : i32
    return %c0_i32, %c0_i32_0 : i32, i32
  }
  func.func @transform_4(%arg0: i32, %arg1: i32) -> (i32, i32) {
    %c0_i32 = arith.constant 0 : i32
    %c0_i32_0 = arith.constant 0 : i32
    %c0_i32_1 = arith.constant 0 : i32
    return %c0_i32, %c0_i32_0 : i32, i32
  }
  func.func @transform_5(%arg0: i32, %arg1: i32) -> (i32, i32, i32) {
    %c0_i32 = arith.constant 0 : i32
    %c0_i32_0 = arith.constant 0 : i32
    return %arg0, %arg1, %c0_i32 : i32, i32, i32
  }
  func.func @transform_6(%arg0: i32, %arg1: i32) -> (i32, i32, i32) {
    %c0_i32 = arith.constant 0 : i32
    %c0_i32_0 = arith.constant 0 : i32
    return %arg0, %arg1, %c0_i32 : i32, i32, i32
  }
  func.func @transform_7(%arg0: i32, %arg1: i32) -> (i32, i32, i32) {
    %c0_i32 = arith.constant 0 : i32
    %c0_i32_0 = arith.constant 0 : i32
    return %arg0, %arg1, %c0_i32 : i32, i32, i32
  }
  func.func @transform_8(%arg0: i32, %arg1: i32) -> (i32, i32, i32) {
    %c0_i32 = arith.constant 0 : i32
    %c0_i32_0 = arith.constant 0 : i32
    return %arg0, %arg1, %c0_i32 : i32, i32, i32
  }
}

module attributes {stable_mosaic.version = 11 : i64} {
  func.func @prenorm_qkv_kernel(%arg0: i32, %arg1: i32, %arg2: memref<1x8x32xbf16, #tpu.memory_space<vmem>>, %arg3: memref<1x8x32xbf16, #tpu.memory_space<vmem>>, %arg4: memref<64x32xbf16, #tpu.memory_space<vmem>>, %arg5: memref<3x32xf32, #tpu.memory_space<vmem>>, %arg6: memref<32x96xbf16, #tpu.memory_space<vmem>>, %arg7: memref<1x8x32xf32, #tpu.memory_space<vmem>>, %arg8: memref<1x8x32xbf16, #tpu.memory_space<vmem>>, %arg9: memref<1x8x32xbf16, #tpu.memory_space<vmem>>, %arg10: memref<1x8x32xbf16, #tpu.memory_space<vmem>>) attributes {dimension_semantics = [#tpu.dimension_semantics<parallel>, #tpu.dimension_semantics<parallel>], iteration_bounds = array<i64: 2, 1>, scalar_prefetch = 0 : i64, scratch_operands = 0 : i64, tpu.core_type = #tpu.core_type<tc>, window_params = [{transform_indices = @transform_0, window_bounds = array<i64: 1, 8, 32>}, {transform_indices = @transform_1, window_bounds = array<i64: 1, 8, 32>}, {pipeline_mode = #tpu.pipeline_mode<synchronous>, transform_indices = @transform_2, window_bounds = array<i64: 64, 32>}, {pipeline_mode = #tpu.pipeline_mode<synchronous>, transform_indices = @transform_3, window_bounds = array<i64: 3, 32>}, {pipeline_mode = #tpu.pipeline_mode<synchronous>, transform_indices = @transform_4, window_bounds = array<i64: 32, 96>}, {transform_indices = @transform_5, window_bounds = array<i64: 1, 8, 32>}, {transform_indices = @transform_6, window_bounds = array<i64: 1, 8, 32>}, {transform_indices = @transform_7, window_bounds = array<i64: 1, 8, 32>}, {transform_indices = @transform_8, window_bounds = array<i64: 1, 8, 32>}]} {
    %c0 = arith.constant 0 : index
    %c0_0 = arith.constant 0 : index
    %c0_1 = arith.constant 0 : index
    %0 = vector.load %arg2[%c0, %c0_0, %c0_1] : memref<1x8x32xbf16, #tpu.memory_space<vmem>>, vector<1x8x32xbf16>
    %1 = vector.shape_cast %0 : vector<1x8x32xbf16> to vector<8x32xbf16>
    %c0_2 = arith.constant 0 : index
    %c0_3 = arith.constant 0 : index
    %c0_4 = arith.constant 0 : index
    %2 = vector.load %arg3[%c0_2, %c0_3, %c0_4] : memref<1x8x32xbf16, #tpu.memory_space<vmem>>, vector<1x8x32xbf16>
    %3 = vector.shape_cast %2 : vector<1x8x32xbf16> to vector<8x32xbf16>
    %c0_5 = arith.constant 0 : index
    %c0_6 = arith.constant 0 : index
    %4 = vector.load %arg4[%c0_5, %c0_6] : memref<64x32xbf16, #tpu.memory_space<vmem>>, vector<32x32xbf16>
    %c32 = arith.constant 32 : index
    %c0_7 = arith.constant 0 : index
    %5 = vector.load %arg4[%c32, %c0_7] : memref<64x32xbf16, #tpu.memory_space<vmem>>, vector<32x32xbf16>
    %cst = arith.constant dense<0.000000e+00> : vector<8x32xf32>
    %6 = tpu.matmul %1, %4, %cst {dimension_numbers = #tpu.dot_dimension_numbers<[1], [0], [0], [1], [0, 0, 1, 1], [], []>} : vector<8x32xbf16>, vector<32x32xbf16>, vector<8x32xf32> -> vector<8x32xf32>
    %cst_8 = arith.constant dense<0.000000e+00> : vector<8x32xf32>
    %7 = tpu.matmul %3, %5, %cst_8 {dimension_numbers = #tpu.dot_dimension_numbers<[1], [0], [0], [1], [0, 0, 1, 1], [], []>} : vector<8x32xbf16>, vector<32x32xbf16>, vector<8x32xf32> -> vector<8x32xf32>
    %8 = arith.addf %6, %7 : vector<8x32xf32>
    %c0_9 = arith.constant 0 : index
    %c0_10 = arith.constant 0 : index
    %9 = vector.load %arg5[%c0_9, %c0_10] : memref<3x32xf32, #tpu.memory_space<vmem>>, vector<1x32xf32>
    %10 = vector.broadcast %9 : vector<1x32xf32> to vector<8x32xf32>
    %11 = arith.addf %8, %10 : vector<8x32xf32>
    %c1 = arith.constant 1 : index
    %c0_11 = arith.constant 0 : index
    %12 = vector.load %arg5[%c1, %c0_11] : memref<3x32xf32, #tpu.memory_space<vmem>>, vector<1x32xf32>
    %c2 = arith.constant 2 : index
    %c0_12 = arith.constant 0 : index
    %13 = vector.load %arg5[%c2, %c0_12] : memref<3x32xf32, #tpu.memory_space<vmem>>, vector<1x32xf32>
    %cst_13 = arith.constant dense<0.000000e+00> : vector<8xf32>
    %14 = vector.multi_reduction <add>, %11, %cst_13 [1] : vector<8x32xf32> to vector<8xf32>
    %15 = vector.shape_cast %14 : vector<8xf32> to vector<8x1xf32>
    %cst_14 = arith.constant 3.200000e+01 : f32
    %16 = vector.broadcast %cst_14 : f32 to vector<8x1xf32>
    %17 = arith.divf %15, %16 : vector<8x1xf32>
    %18 = vector.broadcast %17 : vector<8x1xf32> to vector<8x32xf32>
    %19 = arith.subf %11, %18 : vector<8x32xf32>
    %20 = arith.mulf %19, %19 : vector<8x32xf32>
    %cst_15 = arith.constant dense<0.000000e+00> : vector<8xf32>
    %21 = vector.multi_reduction <add>, %20, %cst_15 [1] : vector<8x32xf32> to vector<8xf32>
    %22 = vector.shape_cast %21 : vector<8xf32> to vector<8x1xf32>
    %cst_16 = arith.constant 3.200000e+01 : f32
    %23 = vector.broadcast %cst_16 : f32 to vector<8x1xf32>
    %24 = arith.divf %22, %23 : vector<8x1xf32>
    %cst_17 = arith.constant 9.99999974E-6 : f32
    %25 = vector.broadcast %cst_17 : f32 to vector<8x1xf32>
    %26 = arith.addf %24, %25 : vector<8x1xf32>
    %27 = math.rsqrt %26 : vector<8x1xf32>
    %28 = vector.broadcast %27 : vector<8x1xf32> to vector<8x32xf32>
    %29 = arith.mulf %19, %28 : vector<8x32xf32>
    %30 = vector.broadcast %12 : vector<1x32xf32> to vector<8x32xf32>
    %31 = arith.mulf %29, %30 : vector<8x32xf32>
    %32 = vector.broadcast %13 : vector<1x32xf32> to vector<8x32xf32>
    %33 = arith.addf %31, %32 : vector<8x32xf32>
    %c0_18 = arith.constant 0 : index
    %c0_19 = arith.constant 0 : index
    %c0_20 = arith.constant 0 : index
    %34 = vector.load %arg7[%c0_18, %c0_19, %c0_20] : memref<1x8x32xf32, #tpu.memory_space<vmem>>, vector<1x8x32xf32>
    %35 = vector.shape_cast %34 : vector<1x8x32xf32> to vector<8x32xf32>
    %36 = vector.shape_cast %33 : vector<8x32xf32> to vector<1x8x32xf32>
    tpu.vector_store %arg7[%c0_18, %c0_19, %c0_20], %36 {strides = array<i32>} : memref<1x8x32xf32, #tpu.memory_space<vmem>>, vector<1x8x32xf32>,
    %37 = arith.truncf %33 : vector<8x32xf32> to vector<8x32xbf16>
    %c0_21 = arith.constant 0 : index
    %c0_22 = arith.constant 0 : index
    %38 = vector.load %arg6[%c0_21, %c0_22] : memref<32x96xbf16, #tpu.memory_space<vmem>>, vector<32x96xbf16>
    %cst_23 = arith.constant dense<0.000000e+00> : vector<8x96xf32>
    %39 = tpu.matmul %37, %38, %cst_23 {dimension_numbers = #tpu.dot_dimension_numbers<[1], [0], [0], [1], [0, 0, 1, 1], [], []>} : vector<8x32xbf16>, vector<32x96xbf16>, vector<8x96xf32> -> vector<8x96xf32>
    %40 = arith.truncf %39 : vector<8x96xf32> to vector<8x96xbf16>
    %41 = vector.extract_strided_slice %40 {offsets = [0, 0], sizes = [8, 32], strides = [1, 1]} : vector<8x96xbf16> to vector<8x32xbf16>
    %c0_24 = arith.constant 0 : index
    %c0_25 = arith.constant 0 : index
    %c0_26 = arith.constant 0 : index
    %42 = vector.load %arg8[%c0_24, %c0_25, %c0_26] : memref<1x8x32xbf16, #tpu.memory_space<vmem>>, vector<1x8x32xbf16>
    %43 = vector.shape_cast %42 : vector<1x8x32xbf16> to vector<8x32xbf16>
    %44 = vector.shape_cast %41 : vector<8x32xbf16> to vector<1x8x32xbf16>
    tpu.vector_store %arg8[%c0_24, %c0_25, %c0_26], %44 {strides = array<i32>} : memref<1x8x32xbf16, #tpu.memory_space<vmem>>, vector<1x8x32xbf16>,
    %45 = vector.extract_strided_slice %40 {offsets = [0, 32], sizes = [8, 32], strides = [1, 1]} : vector<8x96xbf16> to vector<8x32xbf16>
    %c0_27 = arith.constant 0 : index
    %c0_28 = arith.constant 0 : index
    %c0_29 = arith.constant 0 : index
    %46 = vector.load %arg9[%c0_27, %c0_28, %c0_29] : memref<1x8x32xbf16, #tpu.memory_space<vmem>>, vector<1x8x32xbf16>
    %47 = vector.shape_cast %46 : vector<1x8x32xbf16> to vector<8x32xbf16>
    %48 = vector.shape_cast %45 : vector<8x32xbf16> to vector<1x8x32xbf16>
    tpu.vector_store %arg9[%c0_27, %c0_28, %c0_29], %48 {strides = array<i32>} : memref<1x8x32xbf16, #tpu.memory_space<vmem>>, vector<1x8x32xbf16>,
    %49 = vector.extract_strided_slice %40 {offsets = [0, 64], sizes = [8, 32], strides = [1, 1]} : vector<8x96xbf16> to vector<8x32xbf16>
    %c0_30 = arith.constant 0 : index
    %c0_31 = arith.constant 0 : index
    %c0_32 = arith.constant 0 : index
    %50 = vector.load %arg10[%c0_30, %c0_31, %c0_32] : memref<1x8x32xbf16, #tpu.memory_space<vmem>>, vector<1x8x32xbf16>
    %51 = vector.shape_cast %50 : vector<1x8x32xbf16> to vector<8x32xbf16>
    %52 = vector.shape_cast %49 : vector<8x32xbf16> to vector<1x8x32xbf16>
    tpu.vector_store %arg10[%c0_30, %c0_31, %c0_32], %52 {strides = array<i32>} : memref<1x8x32xbf16, #tpu.memory_space<vmem>>, vector<1x8x32xbf16>,
    return
  }
  func.func @transform_0(%arg0: i32, %arg1: i32) -> (i32, i32, i32) {
    %c0_i32 = arith.constant 0 : i32
    %c0_i32_0 = arith.constant 0 : i32
    return %arg0, %arg1, %c0_i32 : i32, i32, i32
  }
  func.func @transform_1(%arg0: i32, %arg1: i32) -> (i32, i32, i32) {
    %c0_i32 = arith.constant 0 : i32
    %c0_i32_0 = arith.constant 0 : i32
    return %arg0, %arg1, %c0_i32 : i32, i32, i32
  }
  func.func @transform_2(%arg0: i32, %arg1: i32) -> (i32, i32) {
    %c0_i32 = arith.constant 0 : i32
    %c0_i32_0 = arith.constant 0 : i32
    %c0_i32_1 = arith.constant 0 : i32
    return %c0_i32, %c0_i32_0 : i32, i32
  }
  func.func @transform_3(%arg0: i32, %arg1: i32) -> (i32, i32) {
    %c0_i32 = arith.constant 0 : i32
    %c0_i32_0 = arith.constant 0 : i32
    %c0_i32_1 = arith.constant 0 : i32
    return %c0_i32, %c0_i32_0 : i32, i32
  }
  func.func @transform_4(%arg0: i32, %arg1: i32) -> (i32, i32) {
    %c0_i32 = arith.constant 0 : i32
    %c0_i32_0 = arith.constant 0 : i32
    %c0_i32_1 = arith.constant 0 : i32
    return %c0_i32, %c0_i32_0 : i32, i32
  }
  func.func @transform_5(%arg0: i32, %arg1: i32) -> (i32, i32, i32) {
    %c0_i32 = arith.constant 0 : i32
    %c0_i32_0 = arith.constant 0 : i32
    return %arg0, %arg1, %c0_i32 : i32, i32, i32
  }
  func.func @transform_6(%arg0: i32, %arg1: i32) -> (i32, i32, i32) {
    %c0_i32 = arith.constant 0 : i32
    %c0_i32_0 = arith.constant 0 : i32
    return %arg0, %arg1, %c0_i32 : i32, i32, i32
  }
  func.func @transform_7(%arg0: i32, %arg1: i32) -> (i32, i32, i32) {
    %c0_i32 = arith.constant 0 : i32
    %c0_i32_0 = arith.constant 0 : i32
    return %arg0, %arg1, %c0_i32 : i32, i32, i32
  }
  func.func @transform_8(%arg0: i32, %arg1: i32) -> (i32, i32, i32) {
    %c0_i32 = arith.constant 0 : i32
    %c0_i32_0 = arith.constant 0 : i32
    return %arg0, %arg1, %c0_i32 : i32, i32, i32
  }
}

</mosaic_0001>

<llo_original>
// kernel: tpu_custom_call.1
$region0: #{tpu_custom_call.1}
  #allocation0 [shape = 'u32[]', space=smem, size = 0x4, offset = 0x4, fixed_abs, tag = 'smem constant byte address 0x4 - core index']
  #allocation1 [shape = 'u32[72,128]{1,0:T(1,128)}', space=vmem, size = 0x9000, scoped, tag = 'internal scratch']
  %s0 = inlined_call_operand.vmem [shape: bf16[2,8,32], index: 0, kind: input, shape index: {}]
  %s1 = inlined_call_operand.vmem [shape: bf16[2,8,32], index: 1, kind: input, shape index: {}]
  %s2 = inlined_call_operand.vmem [shape: bf16[64,32], index: 2, kind: input, shape index: {}]
  %s3 = inlined_call_operand.vmem [shape: f32[3,32], index: 3, kind: input, shape index: {}]
  %s4 = inlined_call_operand.vmem [shape: bf16[32,96], index: 4, kind: input, shape index: {}]
  %s5 = inlined_call_operand.hbm [shape: f32[2,8,32], index: 5, kind: output, shape index: {0}]
  %s6 = inlined_call_operand.hbm [shape: bf16[2,8,32], index: 6, kind: output, shape index: {1}]
  %s7 = inlined_call_operand.hbm [shape: bf16[2,8,32], index: 7, kind: output, shape index: {2}]
  %s8 = inlined_call_operand.hbm [shape: bf16[2,8,32], index: 8, kind: output, shape index: {3}]
  %9 = xla_tuple %s5, %s6, %s7, %s8
  %s10 = sld [smem:[#allocation0]]
  $region77: #{tpu_custom_call.1} parent=0
    _
  %s12 = ssub.s32 1, %s10
  %s13 = scalar_select 0, %s12, %s10
  $region1: #{tpu_custom_call.1} parent=0
    #allocation2 [shape = 'u8[8192]{0}', space=vmem, size = 0x2000, scoped, tag = 'output window, operand 0']
    #allocation3 [shape = 's32[2]{0}', space=sflag, size = 0x8, scoped, tag = 'scoped memory for tpu_custom_call.1']
    #allocation4 [shape = 'u8[4096]{0}', space=vmem, size = 0x1000, scoped, tag = 'output window, operand 1']
    #allocation5 [shape = 's32[2]{0}', space=sflag, size = 0x8, scoped, tag = 'scoped memory for tpu_custom_call.1']
    #allocation6 [shape = 'u8[4096]{0}', space=vmem, size = 0x1000, scoped, tag = 'output window, operand 2']
    #allocation7 [shape = 'u8[4096]{0}', space=vmem, size = 0x1000, scoped, tag = 'output window, operand 3']
    #allocation8 [shape = 's32[2]{0}', space=sflag, size = 0x8, scoped, tag = 'scoped memory for tpu_custom_call.1']
    %14 = vsyncpa [#allocation3], 0
    %s15 = scalar_lea.sflag [#allocation3], 1
    %16 = vsyncpa %s15, 0
    %17 = vsyncpa [#allocation5], 0
    %s18 = scalar_lea.sflag [#allocation5], 1
    %19 = vsyncpa %s18, 0
    %20 = vsyncpa [#allocation8], 0
    %s21 = scalar_lea.sflag [#allocation8], 1
    %22 = vsyncpa %s21, 0
    loop: start=0, step=1, limit=4
    $region2: #{tpu_custom_call.1} parent=1 // loop_pre_header
      _
    $region3: #{tpu_custom_call.1} parent=1 // loop_header
      %s24 = sphi 0, %s28
      %p25 = scmp.ge.s32.totalorder %s24, 4
      %s31 = sphi 0, %s43
      %s32 = sphi 0, %s39
      %s33 = sphi 0, %s31
      %s34 = sphi 0, %s32
      %s35 = sphi 0, %s33
      %s36 = sphi 0, %s34
      %s48 = sphi 0, %s50
      %s51 = sphi 0, %s48
      %s52 = sphi 0, %s51
      %s68 = sphi 0, %s52
      %s76 = sphi 0, %s78
      %s79 = sphi 0, %s76
      %s80 = sphi 0, %s79
      %s96 = sphi 0, %s80
      %s100 = sphi 0, %s100
      %s102 = sphi 0, %s100
      %s103 = sphi 0, %s102
      %s117 = sphi 0, %s103
      %s121 = sphi 0, %s121
      %s123 = sphi 0, %s121
      %s124 = sphi 0, %s123
      %s138 = sphi 0, %s124
      %s142 = sphi 0, %s142
      %s144 = sphi 0, %s142
      %s145 = sphi 0, %s144
      %s159 = sphi 0, %s145
      %s167 = sphi 0, %s169
      %s170 = sphi 0, %s167
      %s171 = sphi 0, %s170
      %s187 = sphi 0, %s171
      %s195 = sphi 0, %s197
      %s198 = sphi 0, %s195
      %s199 = sphi 0, %s198
      %s215 = sphi 0, %s199
      %s223 = sphi 0, %s225
      %s226 = sphi 0, %s223
      %s227 = sphi 0, %s226
      %s243 = sphi 0, %s227
      %s251 = sphi 0, %s253
      %s254 = sphi 0, %s251
      %s255 = sphi 0, %s254
      %s271 = sphi 0, %s255
    $region4: #{tpu_custom_call.1} parent=1 // loop_header_branch
      %27 = sbr.rel (%p25) target = $region8
    $region5: #{tpu_custom_call.1} parent=1 // loop_body
      %s29 = ssub.s32 %s24, 1
      %s30 = ssub.s32 %s24, 2
      %s37 = sadd.s32 1, %s32
      %p38 = scmp.ge.s32.totalorder %s37, 1
      %s39 = scalar_select %p38, 0, %s37
      %s40 = sadd.s32 1, %s31
      %s41 = scalar_select %p38, %s40, %s31
      %p42 = scmp.ge.s32.totalorder %s41, 2
      %s43 = scalar_select %p42, 0, %s41
      %s44 = ssub.s32 %s31, %s43
      %s45 = ssub.s32 %s32, %s39
      %s46 = sor.u32 %s44, %s45
      %p47 = scmp.eq.s32.totalorder %s46, 0
      %s49 = sadd.s32 %s48, 1
      %s50 = scalar_select %p47, %s48, %s49
      %p53 = pneg %p47
      %p54 = scmp.eq.s32.totalorder %s24, 1
      %p55 = por %p53, %p54
      %p56 = scmp.ne.s32.totalorder %s48, %s51
      %p57 = scmp.eq.s32.totalorder %s24, 0
      %p58 = por %p56, %p57
      %p59 = scmp.ne.s32.totalorder %s48, %s51
      %p60 = scmp.eq.s32.totalorder %s29, 1
      %p61 = por %p59, %p60
      %p62 = scmp.ne.s32.totalorder %s51, %s52
      %p63 = scmp.eq.s32.totalorder %s29, 0
      %p64 = por %p62, %p63
      %p65 = scmp.ne.s32.totalorder %s51, %s52
      %p66 = scmp.eq.s32.totalorder %s30, 1
      %p67 = por %p65, %p66
      %p69 = scmp.ne.s32.totalorder %s52, %s68
      %p70 = scmp.eq.s32.totalorder %s30, 0
      %p71 = por %p69, %p70
      %s72 = ssub.s32 %s31, %s43
      %s73 = ssub.s32 %s32, %s39
      %s74 = sor.u32 %s72, %s73
      %p75 = scmp.eq.s32.totalorder %s74, 0
      %s77 = sadd.s32 %s76, 1
      %s78 = scalar_select %p75, %s76, %s77
      %p81 = pneg %p75
      %p82 = scmp.eq.s32.totalorder %s24, 1
      %p83 = por %p81, %p82
      %p84 = scmp.ne.s32.totalorder %s76, %s79
      %p85 = scmp.eq.s32.totalorder %s24, 0
      %p86 = por %p84, %p85
      %p87 = scmp.ne.s32.totalorder %s76, %s79
      %p88 = scmp.eq.s32.totalorder %s29, 1
      %p89 = por %p87, %p88
      %p90 = scmp.ne.s32.totalorder %s79, %s80
      %p91 = scmp.eq.s32.totalorder %s29, 0
      %p92 = por %p90, %p91
      %p93 = scmp.ne.s32.totalorder %s79, %s80
      %p94 = scmp.eq.s32.totalorder %s30, 1
      %p95 = por %p93, %p94
      %p97 = scmp.ne.s32.totalorder %s80, %s96
      %p98 = scmp.eq.s32.totalorder %s30, 0
      %p99 = por %p97, %p98
      %s101 = sadd.s32 %s100, 1
      %p104 = scmp.eq.s32.totalorder %s24, 1
      %p105 = scmp.ne.s32.totalorder %s100, %s102
      %p106 = scmp.eq.s32.totalorder %s24, 0
      %p107 = por %p105, %p106
      %p108 = scmp.ne.s32.totalorder %s100, %s102
      %p109 = scmp.eq.s32.totalorder %s29, 1
      %p110 = por %p108, %p109
      %p111 = scmp.ne.s32.totalorder %s102, %s103
      %p112 = scmp.eq.s32.totalorder %s29, 0
      %p113 = por %p111, %p112
      %p114 = scmp.ne.s32.totalorder %s102, %s103
      %p115 = scmp.eq.s32.totalorder %s30, 1
      %p116 = por %p114, %p115
      %p118 = scmp.ne.s32.totalorder %s103, %s117
      %p119 = scmp.eq.s32.totalorder %s30, 0
      %p120 = por %p118, %p119
      %s122 = sadd.s32 %s121, 1
      %p125 = scmp.eq.s32.totalorder %s24, 1
      %p126 = scmp.ne.s32.totalorder %s121, %s123
      %p127 = scmp.eq.s32.totalorder %s24, 0
      %p128 = por %p126, %p127
      %p129 = scmp.ne.s32.totalorder %s121, %s123
      %p130 = scmp.eq.s32.totalorder %s29, 1
      %p131 = por %p129, %p130
      %p132 = scmp.ne.s32.totalorder %s123, %s124
      %p133 = scmp.eq.s32.totalorder %s29, 0
      %p134 = por %p132, %p133
      %p135 = scmp.ne.s32.totalorder %s123, %s124
      %p136 = scmp.eq.s32.totalorder %s30, 1
      %p137 = por %p135, %p136
      %p139 = scmp.ne.s32.totalorder %s124, %s138
      %p140 = scmp.eq.s32.totalorder %s30, 0
      %p141 = por %p139, %p140
      %s143 = sadd.s32 %s142, 1
      %p146 = scmp.eq.s32.totalorder %s24, 1
      %p147 = scmp.ne.s32.totalorder %s142, %s144
      %p148 = scmp.eq.s32.totalorder %s24, 0
      %p149 = por %p147, %p148
      %p150 = scmp.ne.s32.totalorder %s142, %s144
      %p151 = scmp.eq.s32.totalorder %s29, 1
      %p152 = por %p150, %p151
      %p153 = scmp.ne.s32.totalorder %s144, %s145
      %p154 = scmp.eq.s32.totalorder %s29, 0
      %p155 = por %p153, %p154
      %p156 = scmp.ne.s32.totalorder %s144, %s145
      %p157 = scmp.eq.s32.totalorder %s30, 1
      %p158 = por %p156, %p157
      %p160 = scmp.ne.s32.totalorder %s145, %s159
      %p161 = scmp.eq.s32.totalorder %s30, 0
      %p162 = por %p160, %p161
      %s163 = ssub.s32 %s31, %s43
      %s164 = ssub.s32 %s32, %s39
      %s165 = sor.u32 %s163, %s164
      %p166 = scmp.eq.s32.totalorder %s165, 0
      %s168 = sadd.s32 %s167, 1
      %s169 = scalar_select %p166, %s167, %s168
      %p172 = pneg %p166
      %p173 = scmp.eq.s32.totalorder %s24, 1
      %p174 = por %p172, %p173
      %p175 = scmp.ne.s32.totalorder %s167, %s170
      %p176 = scmp.eq.s32.totalorder %s24, 0
      %p177 = por %p175, %p176
      %p178 = scmp.ne.s32.totalorder %s167, %s170
      %p179 = scmp.eq.s32.totalorder %s29, 1
      %p180 = por %p178, %p179
      %p181 = scmp.ne.s32.totalorder %s170, %s171
      %p182 = scmp.eq.s32.totalorder %s29, 0
      %p183 = por %p181, %p182
      %p184 = scmp.ne.s32.totalorder %s170, %s171
      %p185 = scmp.eq.s32.totalorder %s30, 1
      %p186 = por %p184, %p185
      %p188 = scmp.ne.s32.totalorder %s171, %s187
      %p189 = scmp.eq.s32.totalorder %s30, 0
      %p190 = por %p188, %p189
      %s191 = ssub.s32 %s31, %s43
      %s192 = ssub.s32 %s32, %s39
      %s193 = sor.u32 %s191, %s192
      %p194 = scmp.eq.s32.totalorder %s193, 0
      %s196 = sadd.s32 %s195, 1
      %s197 = scalar_select %p194, %s195, %s196
      %p200 = pneg %p194
      %p201 = scmp.eq.s32.totalorder %s24, 1
      %p202 = por %p200, %p201
      %p203 = scmp.ne.s32.totalorder %s195, %s198
      %p204 = scmp.eq.s32.totalorder %s24, 0
      %p205 = por %p203, %p204
      %p206 = scmp.ne.s32.totalorder %s195, %s198
      %p207 = scmp.eq.s32.totalorder %s29, 1
      %p208 = por %p206, %p207
      %p209 = scmp.ne.s32.totalorder %s198, %s199
      %p210 = scmp.eq.s32.totalorder %s29, 0
      %p211 = por %p209, %p210
      %p212 = scmp.ne.s32.totalorder %s198, %s199
      %p213 = scmp.eq.s32.totalorder %s30, 1
      %p214 = por %p212, %p213
      %p216 = scmp.ne.s32.totalorder %s199, %s215
      %p217 = scmp.eq.s32.totalorder %s30, 0
      %p218 = por %p216, %p217
      %s219 = ssub.s32 %s31, %s43
      %s220 = ssub.s32 %s32, %s39
      %s221 = sor.u32 %s219, %s220
      %p222 = scmp.eq.s32.totalorder %s221, 0
      %s224 = sadd.s32 %s223, 1
      %s225 = scalar_select %p222, %s223, %s224
      %p228 = pneg %p222
      %p229 = scmp.eq.s32.totalorder %s24, 1
      %p230 = por %p228, %p229
      %p231 = scmp.ne.s32.totalorder %s223, %s226
      %p232 = scmp.eq.s32.totalorder %s24, 0
      %p233 = por %p231, %p232
      %p234 = scmp.ne.s32.totalorder %s223, %s226
      %p235 = scmp.eq.s32.totalorder %s29, 1
      %p236 = por %p234, %p235
      %p237 = scmp.ne.s32.totalorder %s226, %s227
      %p238 = scmp.eq.s32.totalorder %s29, 0
      %p239 = por %p237, %p238
      %p240 = scmp.ne.s32.totalorder %s226, %s227
      %p241 = scmp.eq.s32.totalorder %s30, 1
      %p242 = por %p240, %p241
      %p244 = scmp.ne.s32.totalorder %s227, %s243
      %p245 = scmp.eq.s32.totalorder %s30, 0
      %p246 = por %p244, %p245
      %s247 = ssub.s32 %s31, %s43
      %s248 = ssub.s32 %s32, %s39
      %s249 = sor.u32 %s247, %s248
      %p250 = scmp.eq.s32.totalorder %s249, 0
      %s252 = sadd.s32 %s251, 1
      %s253 = scalar_select %p250, %s251, %s252
      %p256 = pneg %p250
      %p257 = scmp.eq.s32.totalorder %s24, 1
      %p258 = por %p256, %p257
      %p259 = scmp.ne.s32.totalorder %s251, %s254
      %p260 = scmp.eq.s32.totalorder %s24, 0
      %p261 = por %p259, %p260
      %p262 = scmp.ne.s32.totalorder %s251, %s254
      %p263 = scmp.eq.s32.totalorder %s29, 1
      %p264 = por %p262, %p263
      %p265 = scmp.ne.s32.totalorder %s254, %s255
      %p266 = scmp.eq.s32.totalorder %s29, 0
      %p267 = por %p265, %p266
      %p268 = scmp.ne.s32.totalorder %s254, %s255
      %p269 = scmp.eq.s32.totalorder %s30, 1
      %p270 = por %p268, %p269
      %p272 = scmp.ne.s32.totalorder %s255, %s271
      %p273 = scmp.eq.s32.totalorder %s30, 0
      %p274 = por %p272, %p273
      %p275 = scmp.le.s32.totalorder 1, %s24
      %p276 = scmp.lt.s32.totalorder %s24, 3
      %p277 = pnand %p275, %p276
      %p278 = pneg %p277
      // Predicated region
      $region9: #{tpu_custom_call.1} parent=5 // pred_check
        _
      $region10: #{tpu_custom_call.1} parent=5 // pred_check_branch
        %280 = sbr.rel (%p277) target = $region12
      $region11: #{tpu_custom_call.1} parent=5 // pred_region
        %s281 = ssub.s32 %s24, 1
        // Predicated region
        $region13: #{tpu_custom_call.1} parent=11 // pred_check
          %p282 = pneg %p113
        $region14: #{tpu_custom_call.1} parent=11 // pred_check_branch
          %284 = sbr.rel (%p282) target = $region16
        $region15: #{tpu_custom_call.1} parent=11 // pred_region
          _
        $region16: #{tpu_custom_call.1} parent=11 // pred_fallthru
          _
        // Predicated region
        $region17: #{tpu_custom_call.1} parent=11 // pred_check
          %p285 = pneg %p134
        $region18: #{tpu_custom_call.1} parent=11 // pred_check_branch
          %287 = sbr.rel (%p285) target = $region20
        $region19: #{tpu_custom_call.1} parent=11 // pred_region
          _
        $region20: #{tpu_custom_call.1} parent=11 // pred_fallthru
          _
        // Predicated region
        $region21: #{tpu_custom_call.1} parent=11 // pred_check
          %p288 = pneg %p155
        $region22: #{tpu_custom_call.1} parent=11 // pred_check_branch
          %290 = sbr.rel (%p288) target = $region24
        $region23: #{tpu_custom_call.1} parent=11 // pred_region
          _
        $region24: #{tpu_custom_call.1} parent=11 // pred_fallthru
          _
      $region12: #{tpu_custom_call.1} parent=5 // pred_fallthru
        _
      %p291 = scmp.lt.s32.totalorder %s24, 2
      // Predicated region
      $region25: #{tpu_custom_call.1} parent=5 // pred_check
        %p292 = pneg %p291
      $region26: #{tpu_custom_call.1} parent=5 // pred_check_branch
        %294 = sbr.rel (%p292) target = $region28
      $region27: #{tpu_custom_call.1} parent=5 // pred_region
        // Predicated region
        $region29: #{tpu_custom_call.1} parent=27 // pred_check
          %p295 = pneg %p58
        $region30: #{tpu_custom_call.1} parent=27 // pred_check_branch
          %297 = sbr.rel (%p295) target = $region32
        $region31: #{tpu_custom_call.1} parent=27 // pred_region
          %p298 = scmp.lt.s32.totalorder %s31, 1
          %s299 = scalar_select %p298, %s31, 1
          %p300 = scmp.lt.s32.totalorder %s32, 0
          %s301 = scalar_select %p300, %s32, 0
          %s302 = sadd.s32 %s301, %s299
          %s303 = smul.addr %s302, 4
          %s304 = scalar_lea.vmem %s0, %s303
        $region32: #{tpu_custom_call.1} parent=27 // pred_fallthru
          _
        // Predicated region
        $region33: #{tpu_custom_call.1} parent=27 // pred_check
          %p305 = pneg %p86
        $region34: #{tpu_custom_call.1} parent=27 // pred_check_branch
          %307 = sbr.rel (%p305) target = $region36
        $region35: #{tpu_custom_call.1} parent=27 // pred_region
          %p308 = scmp.lt.s32.totalorder %s31, 1
          %s309 = scalar_select %p308, %s31, 1
          %p310 = scmp.lt.s32.totalorder %s32, 0
          %s311 = scalar_select %p310, %s32, 0
          %s312 = sadd.s32 %s311, %s309
          %s313 = smul.addr %s312, 4
          %s314 = scalar_lea.vmem %s1, %s313
        $region36: #{tpu_custom_call.1} parent=27 // pred_fallthru
          _
      $region28: #{tpu_custom_call.1} parent=5 // pred_fallthru
        _
      %p315 = scmp.le.s32.totalorder 1, %s24
      %p316 = scmp.lt.s32.totalorder %s24, 3
      %p317 = pnand %p315, %p316
      %p318 = pneg %p317
      // Predicated region
      $region37: #{tpu_custom_call.1} parent=5 // pred_check
        _
      $region38: #{tpu_custom_call.1} parent=5 // pred_check_branch
        %320 = sbr.rel (%p317) target = $region40
      $region39: #{tpu_custom_call.1} parent=5 // pred_region
        %s321 = ssub.s32 %s24, 1
        %p322 = scmp.lt.s32.totalorder %s33, 1
        %s323 = scalar_select %p322, %s33, 1
        %p324 = scmp.lt.s32.totalorder %s34, 0
        %s325 = scalar_select %p324, %s34, 0
        %s326 = sadd.s32 %s325, %s323
        %s327 = smul.addr %s326, 4
        %s328 = scalar_lea.vmem %s0, %s327
        %p329 = pneg %p64
        %p330 = pneg %p61
        %p331 = scmp.lt.s32.totalorder %s33, 1
        %s332 = scalar_select %p331, %s33, 1
        %p333 = scmp.lt.s32.totalorder %s34, 0
        %s334 = scalar_select %p333, %s34, 0
        %s335 = sadd.s32 %s334, %s332
        %s336 = smul.addr %s335, 4
        %s337 = scalar_lea.vmem %s1, %s336
        %p338 = pneg %p92
        %p339 = pneg %p89
        %p340 = pneg %p113
        %p341 = pneg %p110
        %p342 = pneg %p134
        %p343 = pneg %p131
        %p344 = pneg %p155
        %p345 = pneg %p152
        %p346 = pneg %p183
        %p347 = pneg %p180
        %s348 = sand.u32 %s170, 1
        %s349 = scalar_lea.sflag [#allocation3], %s348
        %s350 = sand.u32 %s170, 1
        %s351 = smul.addr %s350, 8
        %s352 = scalar_lea.vmem [#allocation2], %s351
        %p353 = pneg %p211
        %p354 = pneg %p208
        %s355 = sand.u32 %s29, 1
        %s356 = scalar_lea.sflag [#allocation5], %s355
        %s357 = sand.u32 %s198, 1
        %s358 = smul.addr %s357, 4
        %s359 = scalar_lea.vmem [#allocation4], %s358
        %p360 = pneg %p239
        %p361 = pneg %p236
        %s362 = sand.u32 %s29, 1
        %s363 = scalar_lea.sflag [#allocation5], %s362
        %s364 = sand.u32 %s226, 1
        %s365 = smul.addr %s364, 4
        %s366 = scalar_lea.vmem [#allocation6], %s365
        %p367 = pneg %p267
        %p368 = pneg %p264
        %s369 = sand.u32 %s254, 1
        %s370 = scalar_lea.sflag [#allocation8], %s369
        %s371 = sand.u32 %s254, 1
        %s372 = smul.addr %s371, 4
        %s373 = scalar_lea.vmem [#allocation7], %s372
        %p374 = scmp.lt.s32.totalorder %s33, 1
        %s375 = scalar_select %p374, %s33, 1
        %p376 = scmp.lt.s32.totalorder %s34, 0
        %s377 = scalar_select %p376, %s34, 0
        %s378 = sadd.s32 %s377, %s375
        %s379 = smul.addr %s378, 4
        %s380 = scalar_lea.vmem %s0, %s379
        %p381 = scmp.lt.s32.totalorder %s33, 1
        %s382 = scalar_select %p381, %s33, 1
        %p383 = scmp.lt.s32.totalorder %s34, 0
        %s384 = scalar_select %p383, %s34, 0
        %s385 = sadd.s32 %s384, %s382
        %s386 = smul.addr %s385, 4
        %s387 = scalar_lea.vmem %s1, %s386
        %v389 = vld [vmem:[%s380] sm:$0xf]
        %v390 = vld [vmem:[%s387] sm:$0xf]
        %v391 = vld [vmem:[%s2] sm:$0xf]
        %v392 = vld [vmem:[%s2 + $0x4] sm:$0xf]
        %v393 = vld [vmem:[%s2 + $0x8] sm:$0xf]
        %v394 = vld [vmem:[%s2 + $0xc] sm:$0xf]
        %v395 = vld [vmem:[%s2 + $0x10] sm:$0xf]
        %v396 = vld [vmem:[%s2 + $0x14] sm:$0xf]
        %v397 = vld [vmem:[%s2 + $0x18] sm:$0xf]
        %v398 = vld [vmem:[%s2 + $0x1c] sm:$0xf]
        %v403 = vunpack.c.l.b16 %v395
        %v404 = vunpack.c.l.b16 %v396
        %v405 = vunpack.c.l.b16 %v397
        %v406 = vunpack.c.l.b16 %v398
        %v407 = vpack.c.b16 %v404, %v403
        %v408 = vpack.c.b16 %v406, %v405
        %vm411 = vcmask 261120
        %v413 = vsel %vm411, %v390, 0
        %415 = vmatpush.bf16.msra.mxu0 0
        %416 = vmatpush.bf16.msra.mxu0 0
        %417 = vmatpush.bf16.msra.mxu0 0
        %418 = vmatpush.bf16.msra.mxu0 0
        %419 = vmatpush.bf16.msra.mxu0 0
        %420 = vmatpush.bf16.msra.mxu0 0
        %421 = vmatpush.bf16.msra.mxu0 %v408
        %422 = vmatpush.bf16.msra.mxu0 %v407
        %423 = vmatmul.bf16.gmra.mxu0 %v413
        %v424 = vpop.f32.mrf.mxu0
        %v425 = vadd.f32 0.0, %v424
        %v426 = vpop.f32.mrf.mxu0
        %427 = vdwg.mxu0
        %v432 = vunpack.c.l.b16 %v391
        %v433 = vunpack.c.l.b16 %v392
        %v434 = vunpack.c.l.b16 %v393
        %v435 = vunpack.c.l.b16 %v394
        %v436 = vpack.c.b16 %v433, %v432
        %v437 = vpack.c.b16 %v435, %v434
        %v441 = vsel %vm411, %v389, 0
        %443 = vmatpush.bf16.msra.mxu0 0
        %444 = vmatpush.bf16.msra.mxu0 0
        %445 = vmatpush.bf16.msra.mxu0 0
        %446 = vmatpush.bf16.msra.mxu0 0
        %447 = vmatpush.bf16.msra.mxu0 0
        %448 = vmatpush.bf16.msra.mxu0 0
        %449 = vmatpush.bf16.msra.mxu0 %v437
        %450 = vmatpush.bf16.msra.mxu0 %v436
        %451 = vmatmul.bf16.gmra.mxu0 %v441
        %v452 = vpop.f32.mrf.mxu0
        %v453 = vadd.f32 %v425, %v452
        %v454 = vpop.f32.mrf.mxu0
        %455 = vdwg.mxu0
        %v456 = vld [vmem:[%s3] sm:$0x1]
        %v457 = vperm.slane %v456, 0
        %v458 = vadd.f32 %v453, %v457
        %v459 = vld [vmem:[%s3 + $0x1] sm:$0x1]
        %v460 = vld [vmem:[%s3 + $0x2] sm:$0x1]
        %v461 = vsel %vm411, %v458, 0.0
        %462 = vadd.xlane.f32.xlu0 %v461
        %v463 = vpop.xlane.xlu0 %462
        %v464 = vrcp.pop 32.0
        %v465 = vmul.f32 32.0, %v464
        %v466 = vsub.f32 1.0, %v465
        %v467 = vmul.f32 %v464, %v466
        %v468 = vadd.f32 %v464, %v467
        %vm469 = vweird.f32 %v464
        %v470 = vsel %vm469, %v464, %v468
        %v471 = vmul.f32 %v463, %v470
        %v472 = vsub.f32 %v458, %v471
        %v473 = vmul.f32 %v472, %v472
        %v474 = vsel %vm411, %v473, 0.0
        %475 = vadd.xlane.f32.xlu0 %v474
        %v476 = vpop.xlane.xlu0 %475
        %v477 = vmul.f32 %v476, %v470
        %v478 = vadd.f32 %v477, 1e-05
        %v479 = vrsqrt.pop %v478
        %v480 = vmul.f32 %v479, %v478
        %v481 = vmul.f32 %v480, %v479
        %v482 = vmul.f32 0.5, %v481
        %v483 = vsub.f32 1.5, %v482
        %v484 = vmul.f32 %v479, %v483
        %vm485 = vweird.f32 %v478
        %vm486 = vweird.f32 %v479
        %vm487 = vmor %vm485, %vm486
        %v488 = vsel %vm487, %v479, %v484
        %v489 = vmul.f32 %v472, %v488
        %v490 = vperm.slane %v459, 0
        %v491 = vmul.f32 %v489, %v490
        %v492 = vperm.slane %v460, 0
        %v493 = vadd.f32 %v491, %v492
        %494 = vst.msk [vmem:[%s352] sm:$0xff] %vm411, %v493
        %v495 = vpack.c.bf16 %v493, %v493
        %v496 = vld [vmem:[%s4] sm:$0xf]
        %v497 = vld [vmem:[%s4 + $0x4] sm:$0xf]
        %v498 = vld [vmem:[%s4 + $0x8] sm:$0xf]
        %v499 = vld [vmem:[%s4 + $0xc] sm:$0xf]
        %v504 = vunpack.c.l.b16 %v496
        %v505 = vunpack.c.l.b16 %v497
        %v506 = vunpack.c.l.b16 %v498
        %v507 = vunpack.c.l.b16 %v499
        %v508 = vpack.c.b16 %v505, %v504
        %v509 = vpack.c.b16 %v507, %v506
        %v513 = vsel %vm411, %v495, 0
        %515 = vmatpush.bf16.msra.mxu0 0
        %516 = vmatpush.bf16.msra.mxu0 0
        %517 = vmatpush.bf16.msra.mxu0 0
        %518 = vmatpush.bf16.msra.mxu0 0
        %519 = vmatpush.bf16.msra.mxu0 0
        %520 = vmatpush.bf16.msra.mxu0 0
        %521 = vmatpush.bf16.msra.mxu0 %v509
        %522 = vmatpush.bf16.msra.mxu0 %v508
        %523 = vmatmul.bf16.gmra.mxu0 %v513
        %v524 = vpop.f32.mrf.mxu0
        %v525 = vadd.f32 0.0, %v524
        %v526 = vpop.f32.mrf.mxu0
        %527 = vdwg.mxu0
        %v528 = vpack.c.bf16 %v525, %v525
        %vm529 = vcmask 257024
        %530 = vst.msk [vmem:[%s359] sm:$0xf] %vm529, %v528
        %532 = vrot.lane.b32.xlu0 %v528, 96
        %v533 = vpop.permute.xlu0 %532
        %535 = vst.msk [vmem:[%s366] sm:$0xf] %vm529, %v533
        %536 = vrot.lane.b32.xlu0 %v528, 64
        %v537 = vpop.permute.xlu0 %536
        %539 = vst.msk [vmem:[%s373] sm:$0xf] %vm529, %v537
        %s540 = sand.u32 %s170, 1
        %s541 = scalar_lea.sflag [#allocation3], %s540
        %s542 = sand.u32 %s170, 1
        %s543 = smul.addr %s542, 8
        %s544 = scalar_lea.vmem [#allocation2], %s543
        %s545 = sand.u32 %s29, 1
        %s546 = scalar_lea.sflag [#allocation5], %s545
        %s547 = sand.u32 %s198, 1
        %s548 = smul.addr %s547, 4
        %s549 = scalar_lea.vmem [#allocation4], %s548
        %s550 = sand.u32 %s29, 1
        %s551 = scalar_lea.sflag [#allocation5], %s550
        %s552 = sand.u32 %s226, 1
        %s553 = smul.addr %s552, 4
        %s554 = scalar_lea.vmem [#allocation6], %s553
        %s555 = sand.u32 %s254, 1
        %s556 = scalar_lea.sflag [#allocation8], %s555
        %s557 = sand.u32 %s254, 1
        %s558 = smul.addr %s557, 4
        %s559 = scalar_lea.vmem [#allocation7], %s558
        // Predicated region
        $region41: #{tpu_custom_call.1} parent=39 // pred_check
          %p560 = pneg %p180
        $region42: #{tpu_custom_call.1} parent=39 // pred_check_branch
          %562 = sbr.rel (%p560) target = $region44
        $region43: #{tpu_custom_call.1} parent=39 // pred_region
          %564 = vsyncadd %s541, 0
          %s565 = sadd.s32 %s34, %s33
          %s566 = smul.addr %s565, 8
          %s567 = scalar_lea.hbm %s5, %s566
          %s569 = sshll.u32 %s544, 4
          %s570 = int_to_ptr.vmem [resolvable:$true] %s569
          %s571 = sshll.u32 %s567, 4
          %s572 = int_to_ptr.hbm [resolvable:$true] %s571
          %574 = dma.vmem_to_hbm [thread:$0]  %s570, 128, %s572, %s541
        $region44: #{tpu_custom_call.1} parent=39 // pred_fallthru
          _
        // Predicated region
        $region45: #{tpu_custom_call.1} parent=39 // pred_check
          %p575 = pneg %p208
        $region46: #{tpu_custom_call.1} parent=39 // pred_check_branch
          %577 = sbr.rel (%p575) target = $region48
        $region47: #{tpu_custom_call.1} parent=39 // pred_region
          %579 = vsyncadd %s546, 0
          %s580 = sadd.s32 %s34, %s33
          %s581 = smul.addr %s580, 4
          %s582 = scalar_lea.hbm %s6, %s581
          %s584 = sshll.u32 %s549, 4
          %s585 = int_to_ptr.vmem [resolvable:$true] %s584
          %s586 = sshll.u32 %s582, 4
          %s587 = int_to_ptr.hbm [resolvable:$true] %s586
          %589 = dma.vmem_to_hbm [thread:$0]  %s585, 64, %s587, %s546
        $region48: #{tpu_custom_call.1} parent=39 // pred_fallthru
          _
        // Predicated region
        $region49: #{tpu_custom_call.1} parent=39 // pred_check
          %p590 = pneg %p236
        $region50: #{tpu_custom_call.1} parent=39 // pred_check_branch
          %592 = sbr.rel (%p590) target = $region52
        $region51: #{tpu_custom_call.1} parent=39 // pred_region
          %594 = vsyncadd %s551, 0
          %s595 = sadd.s32 %s34, %s33
          %s596 = smul.addr %s595, 4
          %s597 = scalar_lea.hbm %s7, %s596
          %s599 = sshll.u32 %s554, 4
          %s600 = int_to_ptr.vmem [resolvable:$true] %s599
          %s601 = sshll.u32 %s597, 4
          %s602 = int_to_ptr.hbm [resolvable:$true] %s601
          %604 = dma.vmem_to_hbm [thread:$0]  %s600, 64, %s602, %s551
        $region52: #{tpu_custom_call.1} parent=39 // pred_fallthru
          _
        // Predicated region
        $region53: #{tpu_custom_call.1} parent=39 // pred_check
          %p605 = pneg %p264
        $region54: #{tpu_custom_call.1} parent=39 // pred_check_branch
          %607 = sbr.rel (%p605) target = $region56
        $region55: #{tpu_custom_call.1} parent=39 // pred_region
          %609 = vsyncadd %s556, 0
          %s610 = sadd.s32 %s34, %s33
          %s611 = smul.addr %s610, 4
          %s612 = scalar_lea.hbm %s8, %s611
          %s614 = sshll.u32 %s559, 4
          %s615 = int_to_ptr.vmem [resolvable:$true] %s614
          %s616 = sshll.u32 %s612, 4
          %s617 = int_to_ptr.hbm [resolvable:$true] %s616
          %619 = dma.vmem_to_hbm [thread:$0]  %s615, 64, %s617, %s556
        $region56: #{tpu_custom_call.1} parent=39 // pred_fallthru
          _
      $region40: #{tpu_custom_call.1} parent=5 // pred_fallthru
        _
      %p620 = scmp.le.s32.totalorder 2, %s24
      // Predicated region
      $region57: #{tpu_custom_call.1} parent=5 // pred_check
        %p621 = pneg %p620
      $region58: #{tpu_custom_call.1} parent=5 // pred_check_branch
        %623 = sbr.rel (%p621) target = $region60
      $region59: #{tpu_custom_call.1} parent=5 // pred_region
        %s624 = ssub.s32 %s24, 2
        // Predicated region
        $region61: #{tpu_custom_call.1} parent=59 // pred_check
          %p625 = pneg %p186
        $region62: #{tpu_custom_call.1} parent=59 // pred_check_branch
          %627 = sbr.rel (%p625) target = $region64
        $region63: #{tpu_custom_call.1} parent=59 // pred_region
          %s628 = sand.u32 %s171, 1
          %s629 = scalar_lea.sflag [#allocation3], %s628
          %s630 = sand.u32 %s171, 1
          %s631 = smul.addr %s630, 8
          %s632 = scalar_lea.vmem [#allocation2], %s631
          %634 = dma.done %s629, 128
        $region64: #{tpu_custom_call.1} parent=59 // pred_fallthru
          _
        // Predicated region
        $region65: #{tpu_custom_call.1} parent=59 // pred_check
          %p635 = pneg %p214
        $region66: #{tpu_custom_call.1} parent=59 // pred_check_branch
          %637 = sbr.rel (%p635) target = $region68
        $region67: #{tpu_custom_call.1} parent=59 // pred_region
          %s638 = sand.u32 %s30, 1
          %s639 = scalar_lea.sflag [#allocation5], %s638
          %s640 = sand.u32 %s199, 1
          %s641 = smul.addr %s640, 4
          %s642 = scalar_lea.vmem [#allocation4], %s641
          %644 = dma.done %s639, 64
        $region68: #{tpu_custom_call.1} parent=59 // pred_fallthru
          _
        // Predicated region
        $region69: #{tpu_custom_call.1} parent=59 // pred_check
          %p645 = pneg %p242
        $region70: #{tpu_custom_call.1} parent=59 // pred_check_branch
          %647 = sbr.rel (%p645) target = $region72
        $region71: #{tpu_custom_call.1} parent=59 // pred_region
          %s648 = sand.u32 %s30, 1
          %s649 = scalar_lea.sflag [#allocation5], %s648
          %s650 = sand.u32 %s227, 1
          %s651 = smul.addr %s650, 4
          %s652 = scalar_lea.vmem [#allocation6], %s651
          %654 = dma.done %s649, 64
        $region72: #{tpu_custom_call.1} parent=59 // pred_fallthru
          _
        // Predicated region
        $region73: #{tpu_custom_call.1} parent=59 // pred_check
          %p655 = pneg %p270
        $region74: #{tpu_custom_call.1} parent=59 // pred_check_branch
          %657 = sbr.rel (%p655) target = $region76
        $region75: #{tpu_custom_call.1} parent=59 // pred_region
          %s658 = sand.u32 %s255, 1
          %s659 = scalar_lea.sflag [#allocation8], %s658
          %s660 = sand.u32 %s255, 1
          %s661 = smul.addr %s660, 4
          %s662 = scalar_lea.vmem [#allocation7], %s661
          %664 = dma.done %s659, 64
        $region76: #{tpu_custom_call.1} parent=59 // pred_fallthru
          _
      $region60: #{tpu_custom_call.1} parent=5 // pred_fallthru
        _
    $region6: #{tpu_custom_call.1} parent=1 // loop_footer
      %s28 = sadd.s32 1, %s24
    $region7: #{tpu_custom_call.1} parent=1 // loop_footer_branch
      %23 = sbr.rel target = $region3
    $region8: #{tpu_custom_call.1} parent=1 // loop_exit
      _
    %665 = vsyncpa [#allocation3], 1
    %s666 = scalar_lea.sflag [#allocation3], 1
    %667 = vsyncpa %s666, 1
    %668 = vsyncpa [#allocation5], 1
    %s669 = scalar_lea.sflag [#allocation5], 1
    %670 = vsyncpa %s669, 1
    %671 = vsyncpa [#allocation8], 1
    %s672 = scalar_lea.sflag [#allocation8], 1
    %673 = vsyncpa %s672, 1

// kernel: tpu_custom_call.1
$region0: #{tpu_custom_call.1}
  #allocation0 [shape = 'u32[]', space=smem, size = 0x4, offset = 0x4, fixed_abs, tag = 'smem constant byte address 0x4 - core index']
  #allocation1 [shape = 'u32[72,128]{1,0:T(1,128)}', space=vmem, size = 0x9000, scoped, tag = 'internal scratch']
  %s0 = inlined_call_operand.vmem [shape: bf16[2,8,32], index: 0, kind: input, shape index: {}]
  %s1 = inlined_call_operand.vmem [shape: bf16[2,8,32], index: 1, kind: input, shape index: {}]
  %s2 = inlined_call_operand.vmem [shape: bf16[64,32], index: 2, kind: input, shape index: {}]
  %s3 = inlined_call_operand.vmem [shape: f32[3,32], index: 3, kind: input, shape index: {}]
  %s4 = inlined_call_operand.vmem [shape: bf16[32,96], index: 4, kind: input, shape index: {}]
  %s5 = inlined_call_operand.hbm [shape: f32[2,8,32], index: 5, kind: output, shape index: {0}]
  %s6 = inlined_call_operand.hbm [shape: bf16[2,8,32], index: 6, kind: output, shape index: {1}]
  %s7 = inlined_call_operand.hbm [shape: bf16[2,8,32], index: 7, kind: output, shape index: {2}]
  %s8 = inlined_call_operand.hbm [shape: bf16[2,8,32], index: 8, kind: output, shape index: {3}]
  %9 = xla_tuple %s5, %s6, %s7, %s8
  %s10 = sld [smem:[#allocation0]]
  $region77: #{tpu_custom_call.1} parent=0
    _
  %s12 = ssub.s32 1, %s10
  %s13 = scalar_select 0, %s12, %s10
  $region1: #{tpu_custom_call.1} parent=0
    #allocation2 [shape = 'u8[8192]{0}', space=vmem, size = 0x2000, scoped, tag = 'output window, operand 0']
    #allocation3 [shape = 's32[2]{0}', space=sflag, size = 0x8, scoped, tag = 'scoped memory for tpu_custom_call.1']
    #allocation4 [shape = 'u8[4096]{0}', space=vmem, size = 0x1000, scoped, tag = 'output window, operand 1']
    #allocation5 [shape = 's32[2]{0}', space=sflag, size = 0x8, scoped, tag = 'scoped memory for tpu_custom_call.1']
    #allocation6 [shape = 'u8[4096]{0}', space=vmem, size = 0x1000, scoped, tag = 'output window, operand 2']
    #allocation7 [shape = 'u8[4096]{0}', space=vmem, size = 0x1000, scoped, tag = 'output window, operand 3']
    #allocation8 [shape = 's32[2]{0}', space=sflag, size = 0x8, scoped, tag = 'scoped memory for tpu_custom_call.1']
    %14 = vsyncpa [#allocation3], 0
    %s15 = scalar_lea.sflag [#allocation3], 1
    %16 = vsyncpa %s15, 0
    %17 = vsyncpa [#allocation5], 0
    %s18 = scalar_lea.sflag [#allocation5], 1
    %19 = vsyncpa %s18, 0
    %20 = vsyncpa [#allocation8], 0
    %s21 = scalar_lea.sflag [#allocation8], 1
    %22 = vsyncpa %s21, 0
    loop: start=0, step=1, limit=4
    $region2: #{tpu_custom_call.1} parent=1 // loop_pre_header
      _
    $region3: #{tpu_custom_call.1} parent=1 // loop_header
      %s24 = sphi 0, %s28
      %p25 = scmp.ge.s32.totalorder %s24, 4
      %s31 = sphi 0, %s43
      %s32 = sphi 0, %s39
      %s33 = sphi 0, %s31
      %s34 = sphi 0, %s32
      %s35 = sphi 0, %s33
      %s36 = sphi 0, %s34
      %s48 = sphi 0, %s50
      %s51 = sphi 0, %s48
      %s52 = sphi 0, %s51
      %s68 = sphi 0, %s52
      %s76 = sphi 0, %s78
      %s79 = sphi 0, %s76
      %s80 = sphi 0, %s79
      %s96 = sphi 0, %s80
      %s100 = sphi 0, %s100
      %s102 = sphi 0, %s100
      %s103 = sphi 0, %s102
      %s117 = sphi 0, %s103
      %s121 = sphi 0, %s121
      %s123 = sphi 0, %s121
      %s124 = sphi 0, %s123
      %s138 = sphi 0, %s124
      %s142 = sphi 0, %s142
      %s144 = sphi 0, %s142
      %s145 = sphi 0, %s144
      %s159 = sphi 0, %s145
      %s167 = sphi 0, %s169
      %s170 = sphi 0, %s167
      %s171 = sphi 0, %s170
      %s187 = sphi 0, %s171
      %s195 = sphi 0, %s197
      %s198 = sphi 0, %s195
      %s199 = sphi 0, %s198
      %s215 = sphi 0, %s199
      %s223 = sphi 0, %s225
      %s226 = sphi 0, %s223
      %s227 = sphi 0, %s226
      %s243 = sphi 0, %s227
      %s251 = sphi 0, %s253
      %s254 = sphi 0, %s251
      %s255 = sphi 0, %s254
      %s271 = sphi 0, %s255
    $region4: #{tpu_custom_call.1} parent=1 // loop_header_branch
      %27 = sbr.rel (%p25) target = $region8
    $region5: #{tpu_custom_call.1} parent=1 // loop_body
      %s29 = ssub.s32 %s24, 1
      %s30 = ssub.s32 %s24, 2
      %s37 = sadd.s32 1, %s32
      %p38 = scmp.ge.s32.totalorder %s37, 1
      %s39 = scalar_select %p38, 0, %s37
      %s40 = sadd.s32 1, %s31
      %s41 = scalar_select %p38, %s40, %s31
      %p42 = scmp.ge.s32.totalorder %s41, 2
      %s43 = scalar_select %p42, 0, %s41
      %s44 = ssub.s32 %s31, %s43
      %s45 = ssub.s32 %s32, %s39
      %s46 = sor.u32 %s44, %s45
      %p47 = scmp.eq.s32.totalorder %s46, 0
      %s49 = sadd.s32 %s48, 1
      %s50 = scalar_select %p47, %s48, %s49
      %p53 = pneg %p47
      %p54 = scmp.eq.s32.totalorder %s24, 1
      %p55 = por %p53, %p54
      %p56 = scmp.ne.s32.totalorder %s48, %s51
      %p57 = scmp.eq.s32.totalorder %s24, 0
      %p58 = por %p56, %p57
      %p59 = scmp.ne.s32.totalorder %s48, %s51
      %p60 = scmp.eq.s32.totalorder %s29, 1
      %p61 = por %p59, %p60
      %p62 = scmp.ne.s32.totalorder %s51, %s52
      %p63 = scmp.eq.s32.totalorder %s29, 0
      %p64 = por %p62, %p63
      %p65 = scmp.ne.s32.totalorder %s51, %s52
      %p66 = scmp.eq.s32.totalorder %s30, 1
      %p67 = por %p65, %p66
      %p69 = scmp.ne.s32.totalorder %s52, %s68
      %p70 = scmp.eq.s32.totalorder %s30, 0
      %p71 = por %p69, %p70
      %s72 = ssub.s32 %s31, %s43
      %s73 = ssub.s32 %s32, %s39
      %s74 = sor.u32 %s72, %s73
      %p75 = scmp.eq.s32.totalorder %s74, 0
      %s77 = sadd.s32 %s76, 1
      %s78 = scalar_select %p75, %s76, %s77
      %p81 = pneg %p75
      %p82 = scmp.eq.s32.totalorder %s24, 1
      %p83 = por %p81, %p82
      %p84 = scmp.ne.s32.totalorder %s76, %s79
      %p85 = scmp.eq.s32.totalorder %s24, 0
      %p86 = por %p84, %p85
      %p87 = scmp.ne.s32.totalorder %s76, %s79
      %p88 = scmp.eq.s32.totalorder %s29, 1
      %p89 = por %p87, %p88
      %p90 = scmp.ne.s32.totalorder %s79, %s80
      %p91 = scmp.eq.s32.totalorder %s29, 0
      %p92 = por %p90, %p91
      %p93 = scmp.ne.s32.totalorder %s79, %s80
      %p94 = scmp.eq.s32.totalorder %s30, 1
      %p95 = por %p93, %p94
      %p97 = scmp.ne.s32.totalorder %s80, %s96
      %p98 = scmp.eq.s32.totalorder %s30, 0
      %p99 = por %p97, %p98
      %s101 = sadd.s32 %s100, 1
      %p104 = scmp.eq.s32.totalorder %s24, 1
      %p105 = scmp.ne.s32.totalorder %s100, %s102
      %p106 = scmp.eq.s32.totalorder %s24, 0
      %p107 = por %p105, %p106
      %p108 = scmp.ne.s32.totalorder %s100, %s102
      %p109 = scmp.eq.s32.totalorder %s29, 1
      %p110 = por %p108, %p109
      %p111 = scmp.ne.s32.totalorder %s102, %s103
      %p112 = scmp.eq.s32.totalorder %s29, 0
      %p113 = por %p111, %p112
      %p114 = scmp.ne.s32.totalorder %s102, %s103
      %p115 = scmp.eq.s32.totalorder %s30, 1
      %p116 = por %p114, %p115
      %p118 = scmp.ne.s32.totalorder %s103, %s117
      %p119 = scmp.eq.s32.totalorder %s30, 0
      %p120 = por %p118, %p119
      %s122 = sadd.s32 %s121, 1
      %p125 = scmp.eq.s32.totalorder %s24, 1
      %p126 = scmp.ne.s32.totalorder %s121, %s123
      %p127 = scmp.eq.s32.totalorder %s24, 0
      %p128 = por %p126, %p127
      %p129 = scmp.ne.s32.totalorder %s121, %s123
      %p130 = scmp.eq.s32.totalorder %s29, 1
      %p131 = por %p129, %p130
      %p132 = scmp.ne.s32.totalorder %s123, %s124
      %p133 = scmp.eq.s32.totalorder %s29, 0
      %p134 = por %p132, %p133
      %p135 = scmp.ne.s32.totalorder %s123, %s124
      %p136 = scmp.eq.s32.totalorder %s30, 1
      %p137 = por %p135, %p136
      %p139 = scmp.ne.s32.totalorder %s124, %s138
      %p140 = scmp.eq.s32.totalorder %s30, 0
      %p141 = por %p139, %p140
      %s143 = sadd.s32 %s142, 1
      %p146 = scmp.eq.s32.totalorder %s24, 1
      %p147 = scmp.ne.s32.totalorder %s142, %s144
      %p148 = scmp.eq.s32.totalorder %s24, 0
      %p149 = por %p147, %p148
      %p150 = scmp.ne.s32.totalorder %s142, %s144
      %p151 = scmp.eq.s32.totalorder %s29, 1
      %p152 = por %p150, %p151
      %p153 = scmp.ne.s32.totalorder %s144, %s145
      %p154 = scmp.eq.s32.totalorder %s29, 0
      %p155 = por %p153, %p154
      %p156 = scmp.ne.s32.totalorder %s144, %s145
      %p157 = scmp.eq.s32.totalorder %s30, 1
      %p158 = por %p156, %p157
      %p160 = scmp.ne.s32.totalorder %s145, %s159
      %p161 = scmp.eq.s32.totalorder %s30, 0
      %p162 = por %p160, %p161
      %s163 = ssub.s32 %s31, %s43
      %s164 = ssub.s32 %s32, %s39
      %s165 = sor.u32 %s163, %s164
      %p166 = scmp.eq.s32.totalorder %s165, 0
      %s168 = sadd.s32 %s167, 1
      %s169 = scalar_select %p166, %s167, %s168
      %p172 = pneg %p166
      %p173 = scmp.eq.s32.totalorder %s24, 1
      %p174 = por %p172, %p173
      %p175 = scmp.ne.s32.totalorder %s167, %s170
      %p176 = scmp.eq.s32.totalorder %s24, 0
      %p177 = por %p175, %p176
      %p178 = scmp.ne.s32.totalorder %s167, %s170
      %p179 = scmp.eq.s32.totalorder %s29, 1
      %p180 = por %p178, %p179
      %p181 = scmp.ne.s32.totalorder %s170, %s171
      %p182 = scmp.eq.s32.totalorder %s29, 0
      %p183 = por %p181, %p182
      %p184 = scmp.ne.s32.totalorder %s170, %s171
      %p185 = scmp.eq.s32.totalorder %s30, 1
      %p186 = por %p184, %p185
      %p188 = scmp.ne.s32.totalorder %s171, %s187
      %p189 = scmp.eq.s32.totalorder %s30, 0
      %p190 = por %p188, %p189
      %s191 = ssub.s32 %s31, %s43
      %s192 = ssub.s32 %s32, %s39
      %s193 = sor.u32 %s191, %s192
      %p194 = scmp.eq.s32.totalorder %s193, 0
      %s196 = sadd.s32 %s195, 1
      %s197 = scalar_select %p194, %s195, %s196
      %p200 = pneg %p194
      %p201 = scmp.eq.s32.totalorder %s24, 1
      %p202 = por %p200, %p201
      %p203 = scmp.ne.s32.totalorder %s195, %s198
      %p204 = scmp.eq.s32.totalorder %s24, 0
      %p205 = por %p203, %p204
      %p206 = scmp.ne.s32.totalorder %s195, %s198
      %p207 = scmp.eq.s32.totalorder %s29, 1
      %p208 = por %p206, %p207
      %p209 = scmp.ne.s32.totalorder %s198, %s199
      %p210 = scmp.eq.s32.totalorder %s29, 0
      %p211 = por %p209, %p210
      %p212 = scmp.ne.s32.totalorder %s198, %s199
      %p213 = scmp.eq.s32.totalorder %s30, 1
      %p214 = por %p212, %p213
      %p216 = scmp.ne.s32.totalorder %s199, %s215
      %p217 = scmp.eq.s32.totalorder %s30, 0
      %p218 = por %p216, %p217
      %s219 = ssub.s32 %s31, %s43
      %s220 = ssub.s32 %s32, %s39
      %s221 = sor.u32 %s219, %s220
      %p222 = scmp.eq.s32.totalorder %s221, 0
      %s224 = sadd.s32 %s223, 1
      %s225 = scalar_select %p222, %s223, %s224
      %p228 = pneg %p222
      %p229 = scmp.eq.s32.totalorder %s24, 1
      %p230 = por %p228, %p229
      %p231 = scmp.ne.s32.totalorder %s223, %s226
      %p232 = scmp.eq.s32.totalorder %s24, 0
      %p233 = por %p231, %p232
      %p234 = scmp.ne.s32.totalorder %s223, %s226
      %p235 = scmp.eq.s32.totalorder %s29, 1
      %p236 = por %p234, %p235
      %p237 = scmp.ne.s32.totalorder %s226, %s227
      %p238 = scmp.eq.s32.totalorder %s29, 0
      %p239 = por %p237, %p238
      %p240 = scmp.ne.s32.totalorder %s226, %s227
      %p241 = scmp.eq.s32.totalorder %s30, 1
      %p242 = por %p240, %p241
      %p244 = scmp.ne.s32.totalorder %s227, %s243
      %p245 = scmp.eq.s32.totalorder %s30, 0
      %p246 = por %p244, %p245
      %s247 = ssub.s32 %s31, %s43
      %s248 = ssub.s32 %s32, %s39
      %s249 = sor.u32 %s247, %s248
      %p250 = scmp.eq.s32.totalorder %s249, 0
      %s252 = sadd.s32 %s251, 1
      %s253 = scalar_select %p250, %s251, %s252
      %p256 = pneg %p250
      %p257 = scmp.eq.s32.totalorder %s24, 1
      %p258 = por %p256, %p257
      %p259 = scmp.ne.s32.totalorder %s251, %s254
      %p260 = scmp.eq.s32.totalorder %s24, 0
      %p261 = por %p259, %p260
      %p262 = scmp.ne.s32.totalorder %s251, %s254
      %p263 = scmp.eq.s32.totalorder %s29, 1
      %p264 = por %p262, %p263
      %p265 = scmp.ne.s32.totalorder %s254, %s255
      %p266 = scmp.eq.s32.totalorder %s29, 0
      %p267 = por %p265, %p266
      %p268 = scmp.ne.s32.totalorder %s254, %s255
      %p269 = scmp.eq.s32.totalorder %s30, 1
      %p270 = por %p268, %p269
      %p272 = scmp.ne.s32.totalorder %s255, %s271
      %p273 = scmp.eq.s32.totalorder %s30, 0
      %p274 = por %p272, %p273
      %p275 = scmp.le.s32.totalorder 1, %s24
      %p276 = scmp.lt.s32.totalorder %s24, 3
      %p277 = pnand %p275, %p276
      %p278 = pneg %p277
      // Predicated region
      $region9: #{tpu_custom_call.1} parent=5 // pred_check
        _
      $region10: #{tpu_custom_call.1} parent=5 // pred_check_branch
        %280 = sbr.rel (%p277) target = $region12
      $region11: #{tpu_custom_call.1} parent=5 // pred_region
        %s281 = ssub.s32 %s24, 1
        // Predicated region
        $region13: #{tpu_custom_call.1} parent=11 // pred_check
          %p282 = pneg %p113
        $region14: #{tpu_custom_call.1} parent=11 // pred_check_branch
          %284 = sbr.rel (%p282) target = $region16
        $region15: #{tpu_custom_call.1} parent=11 // pred_region
          _
        $region16: #{tpu_custom_call.1} parent=11 // pred_fallthru
          _
        // Predicated region
        $region17: #{tpu_custom_call.1} parent=11 // pred_check
          %p285 = pneg %p134
        $region18: #{tpu_custom_call.1} parent=11 // pred_check_branch
          %287 = sbr.rel (%p285) target = $region20
        $region19: #{tpu_custom_call.1} parent=11 // pred_region
          _
        $region20: #{tpu_custom_call.1} parent=11 // pred_fallthru
          _
        // Predicated region
        $region21: #{tpu_custom_call.1} parent=11 // pred_check
          %p288 = pneg %p155
        $region22: #{tpu_custom_call.1} parent=11 // pred_check_branch
          %290 = sbr.rel (%p288) target = $region24
        $region23: #{tpu_custom_call.1} parent=11 // pred_region
          _
        $region24: #{tpu_custom_call.1} parent=11 // pred_fallthru
          _
      $region12: #{tpu_custom_call.1} parent=5 // pred_fallthru
        _
      %p291 = scmp.lt.s32.totalorder %s24, 2
      // Predicated region
      $region25: #{tpu_custom_call.1} parent=5 // pred_check
        %p292 = pneg %p291
      $region26: #{tpu_custom_call.1} parent=5 // pred_check_branch
        %294 = sbr.rel (%p292) target = $region28
      $region27: #{tpu_custom_call.1} parent=5 // pred_region
        // Predicated region
        $region29: #{tpu_custom_call.1} parent=27 // pred_check
          %p295 = pneg %p58
        $region30: #{tpu_custom_call.1} parent=27 // pred_check_branch
          %297 = sbr.rel (%p295) target = $region32
        $region31: #{tpu_custom_call.1} parent=27 // pred_region
          %p298 = scmp.lt.s32.totalorder %s31, 1
          %s299 = scalar_select %p298, %s31, 1
          %p300 = scmp.lt.s32.totalorder %s32, 0
          %s301 = scalar_select %p300, %s32, 0
          %s302 = sadd.s32 %s301, %s299
          %s303 = smul.addr %s302, 4
          %s304 = scalar_lea.vmem %s0, %s303
        $region32: #{tpu_custom_call.1} parent=27 // pred_fallthru
          _
        // Predicated region
        $region33: #{tpu_custom_call.1} parent=27 // pred_check
          %p305 = pneg %p86
        $region34: #{tpu_custom_call.1} parent=27 // pred_check_branch
          %307 = sbr.rel (%p305) target = $region36
        $region35: #{tpu_custom_call.1} parent=27 // pred_region
          %p308 = scmp.lt.s32.totalorder %s31, 1
          %s309 = scalar_select %p308, %s31, 1
          %p310 = scmp.lt.s32.totalorder %s32, 0
          %s311 = scalar_select %p310, %s32, 0
          %s312 = sadd.s32 %s311, %s309
          %s313 = smul.addr %s312, 4
          %s314 = scalar_lea.vmem %s1, %s313
        $region36: #{tpu_custom_call.1} parent=27 // pred_fallthru
          _
      $region28: #{tpu_custom_call.1} parent=5 // pred_fallthru
        _
      %p315 = scmp.le.s32.totalorder 1, %s24
      %p316 = scmp.lt.s32.totalorder %s24, 3
      %p317 = pnand %p315, %p316
      %p318 = pneg %p317
      // Predicated region
      $region37: #{tpu_custom_call.1} parent=5 // pred_check
        _
      $region38: #{tpu_custom_call.1} parent=5 // pred_check_branch
        %320 = sbr.rel (%p317) target = $region40
      $region39: #{tpu_custom_call.1} parent=5 // pred_region
        %s321 = ssub.s32 %s24, 1
        %p322 = scmp.lt.s32.totalorder %s33, 1
        %s323 = scalar_select %p322, %s33, 1
        %p324 = scmp.lt.s32.totalorder %s34, 0
        %s325 = scalar_select %p324, %s34, 0
        %s326 = sadd.s32 %s325, %s323
        %s327 = smul.addr %s326, 4
        %s328 = scalar_lea.vmem %s0, %s327
        %p329 = pneg %p64
        %p330 = pneg %p61
        %p331 = scmp.lt.s32.totalorder %s33, 1
        %s332 = scalar_select %p331, %s33, 1
        %p333 = scmp.lt.s32.totalorder %s34, 0
        %s334 = scalar_select %p333, %s34, 0
        %s335 = sadd.s32 %s334, %s332
        %s336 = smul.addr %s335, 4
        %s337 = scalar_lea.vmem %s1, %s336
        %p338 = pneg %p92
        %p339 = pneg %p89
        %p340 = pneg %p113
        %p341 = pneg %p110
        %p342 = pneg %p134
        %p343 = pneg %p131
        %p344 = pneg %p155
        %p345 = pneg %p152
        %p346 = pneg %p183
        %p347 = pneg %p180
        %s348 = sand.u32 %s170, 1
        %s349 = scalar_lea.sflag [#allocation3], %s348
        %s350 = sand.u32 %s170, 1
        %s351 = smul.addr %s350, 8
        %s352 = scalar_lea.vmem [#allocation2], %s351
        %p353 = pneg %p211
        %p354 = pneg %p208
        %s355 = sand.u32 %s29, 1
        %s356 = scalar_lea.sflag [#allocation5], %s355
        %s357 = sand.u32 %s198, 1
        %s358 = smul.addr %s357, 4
        %s359 = scalar_lea.vmem [#allocation4], %s358
        %p360 = pneg %p239
        %p361 = pneg %p236
        %s362 = sand.u32 %s29, 1
        %s363 = scalar_lea.sflag [#allocation5], %s362
        %s364 = sand.u32 %s226, 1
        %s365 = smul.addr %s364, 4
        %s366 = scalar_lea.vmem [#allocation6], %s365
        %p367 = pneg %p267
        %p368 = pneg %p264
        %s369 = sand.u32 %s254, 1
        %s370 = scalar_lea.sflag [#allocation8], %s369
        %s371 = sand.u32 %s254, 1
        %s372 = smul.addr %s371, 4
        %s373 = scalar_lea.vmem [#allocation7], %s372
        %p374 = scmp.lt.s32.totalorder %s33, 1
        %s375 = scalar_select %p374, %s33, 1
        %p376 = scmp.lt.s32.totalorder %s34, 0
        %s377 = scalar_select %p376, %s34, 0
        %s378 = sadd.s32 %s377, %s375
        %s379 = smul.addr %s378, 4
        %s380 = scalar_lea.vmem %s0, %s379
        %p381 = scmp.lt.s32.totalorder %s33, 1
        %s382 = scalar_select %p381, %s33, 1
        %p383 = scmp.lt.s32.totalorder %s34, 0
        %s384 = scalar_select %p383, %s34, 0
        %s385 = sadd.s32 %s384, %s382
        %s386 = smul.addr %s385, 4
        %s387 = scalar_lea.vmem %s1, %s386
        %v389 = vld [vmem:[%s380] sm:$0xf]
        %v390 = vld [vmem:[%s387] sm:$0xf]
        %v391 = vld [vmem:[%s2] sm:$0xf]
        %v392 = vld [vmem:[%s2 + $0x4] sm:$0xf]
        %v393 = vld [vmem:[%s2 + $0x8] sm:$0xf]
        %v394 = vld [vmem:[%s2 + $0xc] sm:$0xf]
        %v395 = vld [vmem:[%s2 + $0x10] sm:$0xf]
        %v396 = vld [vmem:[%s2 + $0x14] sm:$0xf]
        %v397 = vld [vmem:[%s2 + $0x18] sm:$0xf]
        %v398 = vld [vmem:[%s2 + $0x1c] sm:$0xf]
        %v403 = vunpack.c.l.b16 %v395
        %v404 = vunpack.c.l.b16 %v396
        %v405 = vunpack.c.l.b16 %v397
        %v406 = vunpack.c.l.b16 %v398
        %v407 = vpack.c.b16 %v404, %v403
        %v408 = vpack.c.b16 %v406, %v405
        %vm411 = vcmask 261120
        %v413 = vsel %vm411, %v390, 0
        %415 = vmatpush.bf16.msra.mxu0 0
        %416 = vmatpush.bf16.msra.mxu0 0
        %417 = vmatpush.bf16.msra.mxu0 0
        %418 = vmatpush.bf16.msra.mxu0 0
        %419 = vmatpush.bf16.msra.mxu0 0
        %420 = vmatpush.bf16.msra.mxu0 0
        %421 = vmatpush.bf16.msra.mxu0 %v408
        %422 = vmatpush.bf16.msra.mxu0 %v407
        %423 = vmatmul.bf16.gmra.mxu0 %v413
        %v424 = vpop.f32.mrf.mxu0
        %v425 = vadd.f32 0.0, %v424
        %v426 = vpop.f32.mrf.mxu0
        %427 = vdwg.mxu0
        %v432 = vunpack.c.l.b16 %v391
        %v433 = vunpack.c.l.b16 %v392
        %v434 = vunpack.c.l.b16 %v393
        %v435 = vunpack.c.l.b16 %v394
        %v436 = vpack.c.b16 %v433, %v432
        %v437 = vpack.c.b16 %v435, %v434
        %v441 = vsel %vm411, %v389, 0
        %443 = vmatpush.bf16.msra.mxu0 0
        %444 = vmatpush.bf16.msra.mxu0 0
        %445 = vmatpush.bf16.msra.mxu0 0
        %446 = vmatpush.bf16.msra.mxu0 0
        %447 = vmatpush.bf16.msra.mxu0 0
        %448 = vmatpush.bf16.msra.mxu0 0
        %449 = vmatpush.bf16.msra.mxu0 %v437
        %450 = vmatpush.bf16.msra.mxu0 %v436
        %451 = vmatmul.bf16.gmra.mxu0 %v441
        %v452 = vpop.f32.mrf.mxu0
        %v453 = vadd.f32 %v425, %v452
        %v454 = vpop.f32.mrf.mxu0
        %455 = vdwg.mxu0
        %v456 = vld [vmem:[%s3] sm:$0x1]
        %v457 = vperm.slane %v456, 0
        %v458 = vadd.f32 %v453, %v457
        %v459 = vld [vmem:[%s3 + $0x1] sm:$0x1]
        %v460 = vld [vmem:[%s3 + $0x2] sm:$0x1]
        %v461 = vsel %vm411, %v458, 0.0
        %462 = vadd.xlane.f32.xlu0 %v461
        %v463 = vpop.xlane.xlu0 %462
        %v464 = vrcp.pop 32.0
        %v465 = vmul.f32 32.0, %v464
        %v466 = vsub.f32 1.0, %v465
        %v467 = vmul.f32 %v464, %v466
        %v468 = vadd.f32 %v464, %v467
        %vm469 = vweird.f32 %v464
        %v470 = vsel %vm469, %v464, %v468
        %v471 = vmul.f32 %v463, %v470
        %v472 = vsub.f32 %v458, %v471
        %v473 = vmul.f32 %v472, %v472
        %v474 = vsel %vm411, %v473, 0.0
        %475 = vadd.xlane.f32.xlu0 %v474
        %v476 = vpop.xlane.xlu0 %475
        %v477 = vmul.f32 %v476, %v470
        %v478 = vadd.f32 %v477, 1e-05
        %v479 = vrsqrt.pop %v478
        %v480 = vmul.f32 %v479, %v478
        %v481 = vmul.f32 %v480, %v479
        %v482 = vmul.f32 0.5, %v481
        %v483 = vsub.f32 1.5, %v482
        %v484 = vmul.f32 %v479, %v483
        %vm485 = vweird.f32 %v478
        %vm486 = vweird.f32 %v479
        %vm487 = vmor %vm485, %vm486
        %v488 = vsel %vm487, %v479, %v484
        %v489 = vmul.f32 %v472, %v488
        %v490 = vperm.slane %v459, 0
        %v491 = vmul.f32 %v489, %v490
        %v492 = vperm.slane %v460, 0
        %v493 = vadd.f32 %v491, %v492
        %494 = vst.msk [vmem:[%s352] sm:$0xff] %vm411, %v493
        %v495 = vpack.c.bf16 %v493, %v493
        %v496 = vld [vmem:[%s4] sm:$0xf]
        %v497 = vld [vmem:[%s4 + $0x4] sm:$0xf]
        %v498 = vld [vmem:[%s4 + $0x8] sm:$0xf]
        %v499 = vld [vmem:[%s4 + $0xc] sm:$0xf]
        %v504 = vunpack.c.l.b16 %v496
        %v505 = vunpack.c.l.b16 %v497
        %v506 = vunpack.c.l.b16 %v498
        %v507 = vunpack.c.l.b16 %v499
        %v508 = vpack.c.b16 %v505, %v504
        %v509 = vpack.c.b16 %v507, %v506
        %v513 = vsel %vm411, %v495, 0
        %515 = vmatpush.bf16.msra.mxu0 0
        %516 = vmatpush.bf16.msra.mxu0 0
        %517 = vmatpush.bf16.msra.mxu0 0
        %518 = vmatpush.bf16.msra.mxu0 0
        %519 = vmatpush.bf16.msra.mxu0 0
        %520 = vmatpush.bf16.msra.mxu0 0
        %521 = vmatpush.bf16.msra.mxu0 %v509
        %522 = vmatpush.bf16.msra.mxu0 %v508
        %523 = vmatmul.bf16.gmra.mxu0 %v513
        %v524 = vpop.f32.mrf.mxu0
        %v525 = vadd.f32 0.0, %v524
        %v526 = vpop.f32.mrf.mxu0
        %527 = vdwg.mxu0
        %v528 = vpack.c.bf16 %v525, %v525
        %vm529 = vcmask 257024
        %530 = vst.msk [vmem:[%s359] sm:$0xf] %vm529, %v528
        %532 = vrot.lane.b32.xlu0 %v528, 96
        %v533 = vpop.permute.xlu0 %532
        %535 = vst.msk [vmem:[%s366] sm:$0xf] %vm529, %v533
        %536 = vrot.lane.b32.xlu0 %v528, 64
        %v537 = vpop.permute.xlu0 %536
        %539 = vst.msk [vmem:[%s373] sm:$0xf] %vm529, %v537
        %s540 = sand.u32 %s170, 1
        %s541 = scalar_lea.sflag [#allocation3], %s540
        %s542 = sand.u32 %s170, 1
        %s543 = smul.addr %s542, 8
        %s544 = scalar_lea.vmem [#allocation2], %s543
        %s545 = sand.u32 %s29, 1
        %s546 = scalar_lea.sflag [#allocation5], %s545
        %s547 = sand.u32 %s198, 1
        %s548 = smul.addr %s547, 4
        %s549 = scalar_lea.vmem [#allocation4], %s548
        %s550 = sand.u32 %s29, 1
        %s551 = scalar_lea.sflag [#allocation5], %s550
        %s552 = sand.u32 %s226, 1
        %s553 = smul.addr %s552, 4
        %s554 = scalar_lea.vmem [#allocation6], %s553
        %s555 = sand.u32 %s254, 1
        %s556 = scalar_lea.sflag [#allocation8], %s555
        %s557 = sand.u32 %s254, 1
        %s558 = smul.addr %s557, 4
        %s559 = scalar_lea.vmem [#allocation7], %s558
        // Predicated region
        $region41: #{tpu_custom_call.1} parent=39 // pred_check
          %p560 = pneg %p180
        $region42: #{tpu_custom_call.1} parent=39 // pred_check_branch
          %562 = sbr.rel (%p560) target = $region44
        $region43: #{tpu_custom_call.1} parent=39 // pred_region
          %564 = vsyncadd %s541, 0
          %s565 = sadd.s32 %s34, %s33
          %s566 = smul.addr %s565, 8
          %s567 = scalar_lea.hbm %s5, %s566
          %s569 = sshll.u32 %s544, 4
          %s570 = int_to_ptr.vmem [resolvable:$true] %s569
          %s571 = sshll.u32 %s567, 4
          %s572 = int_to_ptr.hbm [resolvable:$true] %s571
          %574 = dma.vmem_to_hbm [thread:$0]  %s570, 128, %s572, %s541
        $region44: #{tpu_custom_call.1} parent=39 // pred_fallthru
          _
        // Predicated region
        $region45: #{tpu_custom_call.1} parent=39 // pred_check
          %p575 = pneg %p208
        $region46: #{tpu_custom_call.1} parent=39 // pred_check_branch
          %577 = sbr.rel (%p575) target = $region48
        $region47: #{tpu_custom_call.1} parent=39 // pred_region
          %579 = vsyncadd %s546, 0
          %s580 = sadd.s32 %s34, %s33
          %s581 = smul.addr %s580, 4
          %s582 = scalar_lea.hbm %s6, %s581
          %s584 = sshll.u32 %s549, 4
          %s585 = int_to_ptr.vmem [resolvable:$true] %s584
          %s586 = sshll.u32 %s582, 4
          %s587 = int_to_ptr.hbm [resolvable:$true] %s586
          %589 = dma.vmem_to_hbm [thread:$0]  %s585, 64, %s587, %s546
        $region48: #{tpu_custom_call.1} parent=39 // pred_fallthru
          _
        // Predicated region
        $region49: #{tpu_custom_call.1} parent=39 // pred_check
          %p590 = pneg %p236
        $region50: #{tpu_custom_call.1} parent=39 // pred_check_branch
          %592 = sbr.rel (%p590) target = $region52
        $region51: #{tpu_custom_call.1} parent=39 // pred_region
          %594 = vsyncadd %s551, 0
          %s595 = sadd.s32 %s34, %s33
          %s596 = smul.addr %s595, 4
          %s597 = scalar_lea.hbm %s7, %s596
          %s599 = sshll.u32 %s554, 4
          %s600 = int_to_ptr.vmem [resolvable:$true] %s599
          %s601 = sshll.u32 %s597, 4
          %s602 = int_to_ptr.hbm [resolvable:$true] %s601
          %604 = dma.vmem_to_hbm [thread:$0]  %s600, 64, %s602, %s551
        $region52: #{tpu_custom_call.1} parent=39 // pred_fallthru
          _
        // Predicated region
        $region53: #{tpu_custom_call.1} parent=39 // pred_check
          %p605 = pneg %p264
        $region54: #{tpu_custom_call.1} parent=39 // pred_check_branch
          %607 = sbr.rel (%p605) target = $region56
        $region55: #{tpu_custom_call.1} parent=39 // pred_region
          %609 = vsyncadd %s556, 0
          %s610 = sadd.s32 %s34, %s33
          %s611 = smul.addr %s610, 4
          %s612 = scalar_lea.hbm %s8, %s611
          %s614 = sshll.u32 %s559, 4
          %s615 = int_to_ptr.vmem [resolvable:$true] %s614
          %s616 = sshll.u32 %s612, 4
          %s617 = int_to_ptr.hbm [resolvable:$true] %s616
          %619 = dma.vmem_to_hbm [thread:$0]  %s615, 64, %s617, %s556
        $region56: #{tpu_custom_call.1} parent=39 // pred_fallthru
          _
      $region40: #{tpu_custom_call.1} parent=5 // pred_fallthru
        _
      %p620 = scmp.le.s32.totalorder 2, %s24
      // Predicated region
      $region57: #{tpu_custom_call.1} parent=5 // pred_check
        %p621 = pneg %p620
      $region58: #{tpu_custom_call.1} parent=5 // pred_check_branch
        %623 = sbr.rel (%p621) target = $region60
      $region59: #{tpu_custom_call.1} parent=5 // pred_region
        %s624 = ssub.s32 %s24, 2
        // Predicated region
        $region61: #{tpu_custom_call.1} parent=59 // pred_check
          %p625 = pneg %p186
        $region62: #{tpu_custom_call.1} parent=59 // pred_check_branch
          %627 = sbr.rel (%p625) target = $region64
        $region63: #{tpu_custom_call.1} parent=59 // pred_region
          %s628 = sand.u32 %s171, 1
          %s629 = scalar_lea.sflag [#allocation3], %s628
          %s630 = sand.u32 %s171, 1
          %s631 = smul.addr %s630, 8
          %s632 = scalar_lea.vmem [#allocation2], %s631
          %634 = dma.done %s629, 128
        $region64: #{tpu_custom_call.1} parent=59 // pred_fallthru
          _
        // Predicated region
        $region65: #{tpu_custom_call.1} parent=59 // pred_check
          %p635 = pneg %p214
        $region66: #{tpu_custom_call.1} parent=59 // pred_check_branch
          %637 = sbr.rel (%p635) target = $region68
        $region67: #{tpu_custom_call.1} parent=59 // pred_region
          %s638 = sand.u32 %s30, 1
          %s639 = scalar_lea.sflag [#allocation5], %s638
          %s640 = sand.u32 %s199, 1
          %s641 = smul.addr %s640, 4
          %s642 = scalar_lea.vmem [#allocation4], %s641
          %644 = dma.done %s639, 64
        $region68: #{tpu_custom_call.1} parent=59 // pred_fallthru
          _
        // Predicated region
        $region69: #{tpu_custom_call.1} parent=59 // pred_check
          %p645 = pneg %p242
        $region70: #{tpu_custom_call.1} parent=59 // pred_check_branch
          %647 = sbr.rel (%p645) target = $region72
        $region71: #{tpu_custom_call.1} parent=59 // pred_region
          %s648 = sand.u32 %s30, 1
          %s649 = scalar_lea.sflag [#allocation5], %s648
          %s650 = sand.u32 %s227, 1
          %s651 = smul.addr %s650, 4
          %s652 = scalar_lea.vmem [#allocation6], %s651
          %654 = dma.done %s649, 64
        $region72: #{tpu_custom_call.1} parent=59 // pred_fallthru
          _
        // Predicated region
        $region73: #{tpu_custom_call.1} parent=59 // pred_check
          %p655 = pneg %p270
        $region74: #{tpu_custom_call.1} parent=59 // pred_check_branch
          %657 = sbr.rel (%p655) target = $region76
        $region75: #{tpu_custom_call.1} parent=59 // pred_region
          %s658 = sand.u32 %s255, 1
          %s659 = scalar_lea.sflag [#allocation8], %s658
          %s660 = sand.u32 %s255, 1
          %s661 = smul.addr %s660, 4
          %s662 = scalar_lea.vmem [#allocation7], %s661
          %664 = dma.done %s659, 64
        $region76: #{tpu_custom_call.1} parent=59 // pred_fallthru
          _
      $region60: #{tpu_custom_call.1} parent=5 // pred_fallthru
        _
    $region6: #{tpu_custom_call.1} parent=1 // loop_footer
      %s28 = sadd.s32 1, %s24
    $region7: #{tpu_custom_call.1} parent=1 // loop_footer_branch
      %23 = sbr.rel target = $region3
    $region8: #{tpu_custom_call.1} parent=1 // loop_exit
      _
    %665 = vsyncpa [#allocation3], 1
    %s666 = scalar_lea.sflag [#allocation3], 1
    %667 = vsyncpa %s666, 1
    %668 = vsyncpa [#allocation5], 1
    %s669 = scalar_lea.sflag [#allocation5], 1
    %670 = vsyncpa %s669, 1
    %671 = vsyncpa [#allocation8], 1
    %s672 = scalar_lea.sflag [#allocation8], 1
    %673 = vsyncpa %s672, 1

</llo_original>
